<compile_context>
chip_gen: v5e
topology: v5e:2x2
jax: 0.10.0
libtpu: 0.0.40
codegen_flags: <defaults>
</compile_context>

<pallas_src>
import jax
import jax.numpy as jnp
from jax.experimental import pallas as pl
from jax.experimental.pallas import tpu as pltpu

OUT_DIM = 4  # matches nn.Linear(hidden_dim, 4) in the module spec


# ---------------------------------------------------------------------------
# Fused Pallas kernel: 2 LSTM layers (wavefront) + final Linear
# ---------------------------------------------------------------------------
def _make_kernel(B, T, H, Dp, out_dim):
    def kernel(x_ref, w_ref, b_ref, o_ref):
        """
        x_ref: (T*B, Dp) bf16   time-major flattened input (row = t*B + b)
        w_ref: (3H+Dp, 8H) bf16 packed weights:
                 rows 0:2H        -> wavefront weight [[W_hh1, W_ih2],[0, W_hh2]]
                 rows 2H:2H+Dp    -> W_ih1 (cols 0:4H)
                 rows 2H+Dp:3H+Dp -> W_fc  (cols 0:out_dim)
        b_ref: (3, 4H) f32      rows: b1, b2, b_fc (cols 0:out_dim)
        o_ref: (B, out_dim) f32
        (gate column order everywhere: [i, f, o, g])
        """
        # ---- static slices of the packed parameter buffers ----
        w_wave = w_ref[0:2 * H, :]                               # (2H, 8H) bf16
        w_ih1 = w_ref[2 * H:2 * H + Dp, 0:4 * H]                 # (Dp, 4H) bf16
        w_fc = w_ref[2 * H + Dp:2 * H + Dp + H, 0:out_dim]       # (H, out) bf16
        b1 = b_ref[0:1, :]                                       # (1, 4H) f32
        b2 = jnp.broadcast_to(b_ref[1:2, :], (B, 4 * H))         # hoisted broadcast
        b_fc = b_ref[2:3, 0:out_dim]                             # (1, out) f32

        # ---- hoisted layer-1 input projection (off the serial critical path) ----
        preact1 = (
            jnp.dot(x_ref[...], w_ih1, preferred_element_type=jnp.float32) + b1
        )                                                        # (T*B, 4H) f32

        def gate_math(gates, c):
            # [i, f, o | g]: one sigmoid on a contiguous 3H block + one tanh on H.
            sig = jax.nn.sigmoid(gates[:, :3 * H])
            g = jnp.tanh(gates[:, 3 * H:])
            i = sig[:, 0:H]
            f = sig[:, H:2 * H]
            o = sig[:, 2 * H:3 * H]
            c_new = f * c + i * g
            return o * jnp.tanh(c_new), c_new

        zeros = jnp.zeros((B, H), jnp.float32)
        # prologue: layer-1 step 0 (zero initial state -> no recurrent matmul)
        h1, c1 = gate_math(preact1[0:B, :], zeros)
        h2, c2 = zeros, zeros

        # Wavefront recurrence: ONE (B, 2H)@(2H, 8H) MXU op per step produces both
        # layer-2's step-s gates and layer-1's step-(s+1) recurrent term.
        # T is small and static -> fully unrolled straight-line code.
        for s in range(T):
            lhs = jnp.concatenate([h1, h2], axis=-1).astype(jnp.bfloat16)   # (B, 2H)
            wave = jnp.dot(lhs, w_wave, preferred_element_type=jnp.float32)  # (B, 8H)
            # layer 2, step s
            h2, c2 = gate_math(wave[:, 4 * H:] + b2, c2)
            # layer 1, step s+1 (skip past the last step)
            if s + 1 < T:
                h1, c1 = gate_math(
                    preact1[(s + 1) * B:(s + 2) * B, :] + wave[:, :4 * H], c1)

        # ---- final Linear on the last timestep (bf16 MXU, f32 accumulate) ----
        o_ref[...] = (
            jnp.dot(h2.astype(jnp.bfloat16), w_fc,
                    preferred_element_type=jnp.float32) + b_fc
        )

    return kernel


# ---------------------------------------------------------------------------
# Wrapper
# ---------------------------------------------------------------------------
@jax.jit
def lstm_online_model_forward(x, w_buf, b_buf):
    """x: (B, T, input_dim) float -> (B, 4), matching LSTMOnlineModel.forward."""
    B, T, D = x.shape
    H = b_buf.shape[1] // 4
    Dp = w_buf.shape[0] - 3 * H
    assert Dp >= D

    # time-major flatten: row t*B + b  <->  (batch b, time t); pad D -> Dp with 0s.
    x_flat = jnp.transpose(x, (1, 0, 2)).reshape(T * B, D)
    if Dp > D:
        x_flat = jnp.pad(x_flat, ((0, 0), (0, Dp - D)))
    x_flat = x_flat.astype(jnp.bfloat16)

    vmem = pl.BlockSpec(memory_space=pltpu.MemorySpace.VMEM)
    return pl.pallas_call(
        _make_kernel(B, T, H, Dp, OUT_DIM),
        out_shape=jax.ShapeDtypeStruct((B, OUT_DIM), jnp.float32),
        in_specs=[vmem, vmem, vmem],
        out_specs=vmem,
    )(x_flat, w_buf, b_buf)


# ---------------------------------------------------------------------------
# Parameters: raw PyTorch-layout init + kernel-layout packing
# ---------------------------------------------------------------------------
def init_raw_params(key, input_dim=7, hidden_dim=64, num_layers=2, out_dim=4):
    """Raw weights in torch.nn.LSTM / nn.Linear layout & gate order [i,f,g,o]."""
    raw = {"lstm": []}
    k = 1.0 / jnp.sqrt(hidden_dim)
    for layer in range(num_layers):
        d_in = input_dim if layer == 0 else hidden_dim
        key, k1, k2, k3, k4 = jax.random.split(key, 5)
        raw["lstm"].append({
            "w_ih": jax.random.uniform(k1, (4 * hidden_dim, d_in), jnp.float32, -k, k),
            "w_hh": jax.random.uniform(k2, (4 * hidden_dim, hidden_dim), jnp.float32, -k, k),
            "b_ih": jax.random.uniform(k3, (4 * hidden_dim,), jnp.float32, -k, k),
            "b_hh": jax.random.uniform(k4, (4 * hidden_dim,), jnp.float32, -k, k),
        })
    key, k1, k2 = jax.random.split(key, 3)
    raw["fc_w"] = jax.random.uniform(k1, (out_dim, hidden_dim), jnp.float32, -k, k)
    raw["fc_b"] = jax.random.uniform(k2, (out_dim,), jnp.float32, -k, k)
    return raw


def _permute_gates(a, H):
    """Reorder the 4H gate axis (last axis) from [i,f,g,o] to [i,f,o,g]."""
    return jnp.concatenate(
        [a[..., :2 * H], a[..., 3 * H:4 * H], a[..., 2 * H:3 * H]], axis=-1)


def prepare_params(raw):
    """Transpose, permute gates, fold biases, build the 2 packed kernel buffers."""
    l1, l2 = raw["lstm"]
    H = l1["w_hh"].shape[1]
    D = l1["w_ih"].shape[1]
    Dp = -(-D // 8) * 8                       # pad input dim to sublane multiple
    out_dim = raw["fc_w"].shape[0]

    w_ih1 = _permute_gates(l1["w_ih"].T, H)   # (D, 4H)
    w_hh1 = _permute_gates(l1["w_hh"].T, H)   # (H, 4H)
    w_ih2 = _permute_gates(l2["w_ih"].T, H)   # (H, 4H)
    w_hh2 = _permute_gates(l2["w_hh"].T, H)   # (H, 4H)
    b1 = _permute_gates((l1["b_ih"] + l1["b_hh"]).reshape(1, -1), H)
    b2 = _permute_gates((l2["b_ih"] + l2["b_hh"]).reshape(1, -1), H)
    fc_w = raw["fc_w"].T                      # (H, out)
    fc_b = raw["fc_b"].reshape(1, -1)         # (1, out)

    # wavefront weight: LHS is [h1 | h2] (2H cols)
    #   cols 0:4H  -> h1 @ W_hh1                  (layer-1 recurrent, step s+1)
    #   cols 4H:8H -> h1 @ W_ih2 + h2 @ W_hh2     (layer-2 gates, step s)
    w_wave = jnp.concatenate([
        jnp.concatenate([w_hh1, w_ih2], axis=1),
        jnp.concatenate([jnp.zeros((H, 4 * H), w_hh2.dtype), w_hh2], axis=1),
    ], axis=0)                                # (2H, 8H)

    w_ih1_p = jnp.zeros((Dp, 8 * H), w_ih1.dtype).at[:D, :4 * H].set(w_ih1)
    w_fc_p = jnp.zeros((H, 8 * H), fc_w.dtype).at[:, :out_dim].set(fc_w)
    w_buf = jnp.concatenate([w_wave, w_ih1_p, w_fc_p], axis=0).astype(jnp.bfloat16)

    b_fc_p = jnp.zeros((1, 4 * H), fc_b.dtype).at[:, :out_dim].set(fc_b)
    b_buf = jnp.concatenate([b1, b2, b_fc_p], axis=0).astype(jnp.float32)  # (3, 4H)
    return w_buf, b_buf


# ---------------------------------------------------------------------------
# Pure-JAX reference (torch gate order [i,f,g,o], matching bf16 MXU precision)
# ---------------------------------------------------------------------------
def reference_forward(x, raw):
    H = raw["lstm"][0]["w_hh"].shape[1]
    h_seq = jnp.transpose(x, (1, 0, 2)).astype(jnp.float32)   # (T, B, D)
    for lyr in raw["lstm"]:
        w_ih_t = lyr["w_ih"].T.astype(jnp.bfloat16)
        w_hh_t = lyr["w_hh"].T.astype(jnp.bfloat16)
        bias = (lyr["b_ih"] + lyr["b_hh"]).reshape(1, -1)
        B = h_seq.shape[1]

        def step(carry, x_t, w_ih_t=w_ih_t, w_hh_t=w_hh_t, bias=bias):
            h, c = carry
            gates = (
                jnp.dot(x_t.astype(jnp.bfloat16), w_ih_t,
                        preferred_element_type=jnp.float32)
                + jnp.dot(h.astype(jnp.bfloat16), w_hh_t,
                          preferred_element_type=jnp.float32)
                + bias
            )
            i = jax.nn.sigmoid(gates[:, 0 * H:1 * H])
            f = jax.nn.sigmoid(gates[:, 1 * H:2 * H])
            g = jnp.tanh(gates[:, 2 * H:3 * H])
            o = jax.nn.sigmoid(gates[:, 3 * H:4 * H])
            c_new = f * c + i * g
            h_new = o * jnp.tanh(c_new)
            return (h_new, c_new), h_new

        init = (jnp.zeros((B, H), jnp.float32), jnp.zeros((B, H), jnp.float32))
        _, h_seq = jax.lax.scan(step, init, h_seq)
    h_last = h_seq[-1]
    return (jnp.dot(h_last.astype(jnp.bfloat16),
                    raw["fc_w"].T.astype(jnp.bfloat16),
                    preferred_element_type=jnp.float32)
            + raw["fc_b"].reshape(1, -1))


# ---------------------------------------------------------------------------
if __name__ == "__main__":
    B, T, D = 2, 8, 7
    key = jax.random.PRNGKey(0)
    key, kx, kp = jax.random.split(key, 3)
    x = jax.random.normal(kx, (B, T, D), jnp.float32)

    raw = init_raw_params(kp, input_dim=D, hidden_dim=64, num_layers=2,
                          out_dim=OUT_DIM)
    w_buf, b_buf = prepare_params(raw)

    out = lstm_online_model_forward(x, w_buf, b_buf)
    out = jax.block_until_ready(out)
    assert out.shape == (B, OUT_DIM), out.shape

    ref = reference_forward(x, raw)
    assert jnp.allclose(out, ref, atol=5e-3, rtol=5e-3), (out, ref)

    print("KERNEL_OK")
</pallas_src>

<mosaic_0001>
module attributes {stable_mosaic.version = 11 : i64} {
  func.func @kernel(%arg0: memref<16x8xbf16, #tpu.memory_space<vmem>>, %arg1: memref<200x512xbf16, #tpu.memory_space<vmem>>, %arg2: memref<3x256xf32, #tpu.memory_space<vmem>>, %arg3: memref<2x4xf32, #tpu.memory_space<vmem>>) attributes {dimension_semantics = [], scalar_prefetch = 0 : i64, scratch_operands = 0 : i64, tpu.core_type = #tpu.core_type<tc>} {
    %c0 = arith.constant 0 : index
    %c0_0 = arith.constant 0 : index
    %0 = vector.load %arg1[%c0, %c0_0] : memref<200x512xbf16, #tpu.memory_space<vmem>>, vector<128x512xbf16>
    %c128 = arith.constant 128 : index
    %c0_1 = arith.constant 0 : index
    %1 = vector.load %arg1[%c128, %c0_1] : memref<200x512xbf16, #tpu.memory_space<vmem>>, vector<8x256xbf16>
    %c136 = arith.constant 136 : index
    %c0_2 = arith.constant 0 : index
    %2 = vector.load %arg1[%c136, %c0_2] : memref<200x512xbf16, #tpu.memory_space<vmem>>, vector<64x4xbf16>
    %c0_3 = arith.constant 0 : index
    %c0_4 = arith.constant 0 : index
    %3 = vector.load %arg2[%c0_3, %c0_4] : memref<3x256xf32, #tpu.memory_space<vmem>>, vector<1x256xf32>
    %c1 = arith.constant 1 : index
    %c0_5 = arith.constant 0 : index
    %4 = vector.load %arg2[%c1, %c0_5] : memref<3x256xf32, #tpu.memory_space<vmem>>, vector<1x256xf32>
    %5 = vector.shape_cast %4 : vector<1x256xf32> to vector<1x256xf32>
    %6 = vector.broadcast %5 : vector<1x256xf32> to vector<2x256xf32>
    %c2 = arith.constant 2 : index
    %c0_6 = arith.constant 0 : index
    %7 = vector.load %arg2[%c2, %c0_6] : memref<3x256xf32, #tpu.memory_space<vmem>>, vector<1x4xf32>
    %c0_7 = arith.constant 0 : index
    %c0_8 = arith.constant 0 : index
    %8 = vector.load %arg0[%c0_7, %c0_8] : memref<16x8xbf16, #tpu.memory_space<vmem>>, vector<16x8xbf16>
    %cst = arith.constant dense<0.000000e+00> : vector<16x256xf32>
    %9 = tpu.matmul %8, %1, %cst {dimension_numbers = #tpu.dot_dimension_numbers<[1], [0], [0], [1], [0, 0, 1, 1], [], []>} : vector<16x8xbf16>, vector<8x256xbf16>, vector<16x256xf32> -> vector<16x256xf32>
    %10 = vector.broadcast %3 : vector<1x256xf32> to vector<16x256xf32>
    %11 = arith.addf %9, %10 : vector<16x256xf32>
    %cst_9 = arith.constant 0.000000e+00 : f32
    %12 = vector.broadcast %cst_9 : f32 to vector<2x64xf32>
    %13 = vector.extract_strided_slice %11 {offsets = [0, 0], sizes = [2, 256], strides = [1, 1]} : vector<16x256xf32> to vector<2x256xf32>
    %14 = vector.extract_strided_slice %13 {offsets = [0, 0], sizes = [2, 192], strides = [1, 1]} : vector<2x256xf32> to vector<2x192xf32>
    %15 = arith.negf %14 : vector<2x192xf32>
    %16 = math.exp %15 : vector<2x192xf32>
    %cst_10 = arith.constant 1.000000e+00 : f32
    %17 = vector.broadcast %cst_10 : f32 to vector<2x192xf32>
    %18 = arith.addf %17, %16 : vector<2x192xf32>
    %19 = arith.divf %17, %18 : vector<2x192xf32>
    %20 = vector.extract_strided_slice %13 {offsets = [0, 192], sizes = [2, 64], strides = [1, 1]} : vector<2x256xf32> to vector<2x64xf32>
    %21 = math.tanh %20 : vector<2x64xf32>
    %22 = vector.extract_strided_slice %19 {offsets = [0, 0], sizes = [2, 64], strides = [1, 1]} : vector<2x192xf32> to vector<2x64xf32>
    %23 = vector.extract_strided_slice %19 {offsets = [0, 64], sizes = [2, 64], strides = [1, 1]} : vector<2x192xf32> to vector<2x64xf32>
    %24 = vector.extract_strided_slice %19 {offsets = [0, 128], sizes = [2, 64], strides = [1, 1]} : vector<2x192xf32> to vector<2x64xf32>
    %25 = arith.mulf %23, %12 : vector<2x64xf32>
    %26 = arith.mulf %22, %21 : vector<2x64xf32>
    %27 = arith.addf %25, %26 : vector<2x64xf32>
    %28 = math.tanh %27 : vector<2x64xf32>
    %29 = arith.mulf %24, %28 : vector<2x64xf32>
    %30 = tpu.concatenate %29, %12 in 1 : vector<2x64xf32>, vector<2x64xf32> -> vector<2x128xf32>
    %31 = arith.truncf %30 : vector<2x128xf32> to vector<2x128xbf16>
    %cst_11 = arith.constant dense<0.000000e+00> : vector<2x512xf32>
    %32 = tpu.matmul %31, %0, %cst_11 {dimension_numbers = #tpu.dot_dimension_numbers<[1], [0], [0], [1], [0, 0, 1, 1], [], []>} : vector<2x128xbf16>, vector<128x512xbf16>, vector<2x512xf32> -> vector<2x512xf32>
    %33 = vector.extract_strided_slice %32 {offsets = [0, 256], sizes = [2, 256], strides = [1, 1]} : vector<2x512xf32> to vector<2x256xf32>
    %34 = arith.addf %33, %6 : vector<2x256xf32>
    %35 = vector.extract_strided_slice %34 {offsets = [0, 0], sizes = [2, 192], strides = [1, 1]} : vector<2x256xf32> to vector<2x192xf32>
    %36 = arith.negf %35 : vector<2x192xf32>
    %37 = math.exp %36 : vector<2x192xf32>
    %cst_12 = arith.constant 1.000000e+00 : f32
    %38 = vector.broadcast %cst_12 : f32 to vector<2x192xf32>
    %39 = arith.addf %38, %37 : vector<2x192xf32>
    %40 = arith.divf %38, %39 : vector<2x192xf32>
    %41 = vector.extract_strided_slice %34 {offsets = [0, 192], sizes = [2, 64], strides = [1, 1]} : vector<2x256xf32> to vector<2x64xf32>
    %42 = math.tanh %41 : vector<2x64xf32>
    %43 = vector.extract_strided_slice %40 {offsets = [0, 0], sizes = [2, 64], strides = [1, 1]} : vector<2x192xf32> to vector<2x64xf32>
    %44 = vector.extract_strided_slice %40 {offsets = [0, 64], sizes = [2, 64], strides = [1, 1]} : vector<2x192xf32> to vector<2x64xf32>
    %45 = vector.extract_strided_slice %40 {offsets = [0, 128], sizes = [2, 64], strides = [1, 1]} : vector<2x192xf32> to vector<2x64xf32>
    %46 = arith.mulf %44, %12 : vector<2x64xf32>
    %47 = arith.mulf %43, %42 : vector<2x64xf32>
    %48 = arith.addf %46, %47 : vector<2x64xf32>
    %49 = math.tanh %48 : vector<2x64xf32>
    %50 = arith.mulf %45, %49 : vector<2x64xf32>
    %51 = vector.extract_strided_slice %11 {offsets = [2, 0], sizes = [2, 256], strides = [1, 1]} : vector<16x256xf32> to vector<2x256xf32>
    %52 = vector.extract_strided_slice %32 {offsets = [0, 0], sizes = [2, 256], strides = [1, 1]} : vector<2x512xf32> to vector<2x256xf32>
    %53 = arith.addf %51, %52 : vector<2x256xf32>
    %54 = vector.extract_strided_slice %53 {offsets = [0, 0], sizes = [2, 192], strides = [1, 1]} : vector<2x256xf32> to vector<2x192xf32>
    %55 = arith.negf %54 : vector<2x192xf32>
    %56 = math.exp %55 : vector<2x192xf32>
    %cst_13 = arith.constant 1.000000e+00 : f32
    %57 = vector.broadcast %cst_13 : f32 to vector<2x192xf32>
    %58 = arith.addf %57, %56 : vector<2x192xf32>
    %59 = arith.divf %57, %58 : vector<2x192xf32>
    %60 = vector.extract_strided_slice %53 {offsets = [0, 192], sizes = [2, 64], strides = [1, 1]} : vector<2x256xf32> to vector<2x64xf32>
    %61 = math.tanh %60 : vector<2x64xf32>
    %62 = vector.extract_strided_slice %59 {offsets = [0, 0], sizes = [2, 64], strides = [1, 1]} : vector<2x192xf32> to vector<2x64xf32>
    %63 = vector.extract_strided_slice %59 {offsets = [0, 64], sizes = [2, 64], strides = [1, 1]} : vector<2x192xf32> to vector<2x64xf32>
    %64 = vector.extract_strided_slice %59 {offsets = [0, 128], sizes = [2, 64], strides = [1, 1]} : vector<2x192xf32> to vector<2x64xf32>
    %65 = arith.mulf %63, %27 : vector<2x64xf32>
    %66 = arith.mulf %62, %61 : vector<2x64xf32>
    %67 = arith.addf %65, %66 : vector<2x64xf32>
    %68 = math.tanh %67 : vector<2x64xf32>
    %69 = arith.mulf %64, %68 : vector<2x64xf32>
    %70 = tpu.concatenate %69, %50 in 1 : vector<2x64xf32>, vector<2x64xf32> -> vector<2x128xf32>
    %71 = arith.truncf %70 : vector<2x128xf32> to vector<2x128xbf16>
    %cst_14 = arith.constant dense<0.000000e+00> : vector<2x512xf32>
    %72 = tpu.matmul %71, %0, %cst_14 {dimension_numbers = #tpu.dot_dimension_numbers<[1], [0], [0], [1], [0, 0, 1, 1], [], []>} : vector<2x128xbf16>, vector<128x512xbf16>, vector<2x512xf32> -> vector<2x512xf32>
    %73 = vector.extract_strided_slice %72 {offsets = [0, 256], sizes = [2, 256], strides = [1, 1]} : vector<2x512xf32> to vector<2x256xf32>
    %74 = arith.addf %73, %6 : vector<2x256xf32>
    %75 = vector.extract_strided_slice %74 {offsets = [0, 0], sizes = [2, 192], strides = [1, 1]} : vector<2x256xf32> to vector<2x192xf32>
    %76 = arith.negf %75 : vector<2x192xf32>
    %77 = math.exp %76 : vector<2x192xf32>
    %cst_15 = arith.constant 1.000000e+00 : f32
    %78 = vector.broadcast %cst_15 : f32 to vector<2x192xf32>
    %79 = arith.addf %78, %77 : vector<2x192xf32>
    %80 = arith.divf %78, %79 : vector<2x192xf32>
    %81 = vector.extract_strided_slice %74 {offsets = [0, 192], sizes = [2, 64], strides = [1, 1]} : vector<2x256xf32> to vector<2x64xf32>
    %82 = math.tanh %81 : vector<2x64xf32>
    %83 = vector.extract_strided_slice %80 {offsets = [0, 0], sizes = [2, 64], strides = [1, 1]} : vector<2x192xf32> to vector<2x64xf32>
    %84 = vector.extract_strided_slice %80 {offsets = [0, 64], sizes = [2, 64], strides = [1, 1]} : vector<2x192xf32> to vector<2x64xf32>
    %85 = vector.extract_strided_slice %80 {offsets = [0, 128], sizes = [2, 64], strides = [1, 1]} : vector<2x192xf32> to vector<2x64xf32>
    %86 = arith.mulf %84, %48 : vector<2x64xf32>
    %87 = arith.mulf %83, %82 : vector<2x64xf32>
    %88 = arith.addf %86, %87 : vector<2x64xf32>
    %89 = math.tanh %88 : vector<2x64xf32>
    %90 = arith.mulf %85, %89 : vector<2x64xf32>
    %91 = vector.extract_strided_slice %11 {offsets = [4, 0], sizes = [2, 256], strides = [1, 1]} : vector<16x256xf32> to vector<2x256xf32>
    %92 = vector.extract_strided_slice %72 {offsets = [0, 0], sizes = [2, 256], strides = [1, 1]} : vector<2x512xf32> to vector<2x256xf32>
    %93 = arith.addf %91, %92 : vector<2x256xf32>
    %94 = vector.extract_strided_slice %93 {offsets = [0, 0], sizes = [2, 192], strides = [1, 1]} : vector<2x256xf32> to vector<2x192xf32>
    %95 = arith.negf %94 : vector<2x192xf32>
    %96 = math.exp %95 : vector<2x192xf32>
    %cst_16 = arith.constant 1.000000e+00 : f32
    %97 = vector.broadcast %cst_16 : f32 to vector<2x192xf32>
    %98 = arith.addf %97, %96 : vector<2x192xf32>
    %99 = arith.divf %97, %98 : vector<2x192xf32>
    %100 = vector.extract_strided_slice %93 {offsets = [0, 192], sizes = [2, 64], strides = [1, 1]} : vector<2x256xf32> to vector<2x64xf32>
    %101 = math.tanh %100 : vector<2x64xf32>
    %102 = vector.extract_strided_slice %99 {offsets = [0, 0], sizes = [2, 64], strides = [1, 1]} : vector<2x192xf32> to vector<2x64xf32>
    %103 = vector.extract_strided_slice %99 {offsets = [0, 64], sizes = [2, 64], strides = [1, 1]} : vector<2x192xf32> to vector<2x64xf32>
    %104 = vector.extract_strided_slice %99 {offsets = [0, 128], sizes = [2, 64], strides = [1, 1]} : vector<2x192xf32> to vector<2x64xf32>
    %105 = arith.mulf %103, %67 : vector<2x64xf32>
    %106 = arith.mulf %102, %101 : vector<2x64xf32>
    %107 = arith.addf %105, %106 : vector<2x64xf32>
    %108 = math.tanh %107 : vector<2x64xf32>
    %109 = arith.mulf %104, %108 : vector<2x64xf32>
    %110 = tpu.concatenate %109, %90 in 1 : vector<2x64xf32>, vector<2x64xf32> -> vector<2x128xf32>
    %111 = arith.truncf %110 : vector<2x128xf32> to vector<2x128xbf16>
    %cst_17 = arith.constant dense<0.000000e+00> : vector<2x512xf32>
    %112 = tpu.matmul %111, %0, %cst_17 {dimension_numbers = #tpu.dot_dimension_numbers<[1], [0], [0], [1], [0, 0, 1, 1], [], []>} : vector<2x128xbf16>, vector<128x512xbf16>, vector<2x512xf32> -> vector<2x512xf32>
    %113 = vector.extract_strided_slice %112 {offsets = [0, 256], sizes = [2, 256], strides = [1, 1]} : vector<2x512xf32> to vector<2x256xf32>
    %114 = arith.addf %113, %6 : vector<2x256xf32>
    %115 = vector.extract_strided_slice %114 {offsets = [0, 0], sizes = [2, 192], strides = [1, 1]} : vector<2x256xf32> to vector<2x192xf32>
    %116 = arith.negf %115 : vector<2x192xf32>
    %117 = math.exp %116 : vector<2x192xf32>
    %cst_18 = arith.constant 1.000000e+00 : f32
    %118 = vector.broadcast %cst_18 : f32 to vector<2x192xf32>
    %119 = arith.addf %118, %117 : vector<2x192xf32>
    %120 = arith.divf %118, %119 : vector<2x192xf32>
    %121 = vector.extract_strided_slice %114 {offsets = [0, 192], sizes = [2, 64], strides = [1, 1]} : vector<2x256xf32> to vector<2x64xf32>
    %122 = math.tanh %121 : vector<2x64xf32>
    %123 = vector.extract_strided_slice %120 {offsets = [0, 0], sizes = [2, 64], strides = [1, 1]} : vector<2x192xf32> to vector<2x64xf32>
    %124 = vector.extract_strided_slice %120 {offsets = [0, 64], sizes = [2, 64], strides = [1, 1]} : vector<2x192xf32> to vector<2x64xf32>
    %125 = vector.extract_strided_slice %120 {offsets = [0, 128], sizes = [2, 64], strides = [1, 1]} : vector<2x192xf32> to vector<2x64xf32>
    %126 = arith.mulf %124, %88 : vector<2x64xf32>
    %127 = arith.mulf %123, %122 : vector<2x64xf32>
    %128 = arith.addf %126, %127 : vector<2x64xf32>
    %129 = math.tanh %128 : vector<2x64xf32>
    %130 = arith.mulf %125, %129 : vector<2x64xf32>
    %131 = vector.extract_strided_slice %11 {offsets = [6, 0], sizes = [2, 256], strides = [1, 1]} : vector<16x256xf32> to vector<2x256xf32>
    %132 = vector.extract_strided_slice %112 {offsets = [0, 0], sizes = [2, 256], strides = [1, 1]} : vector<2x512xf32> to vector<2x256xf32>
    %133 = arith.addf %131, %132 : vector<2x256xf32>
    %134 = vector.extract_strided_slice %133 {offsets = [0, 0], sizes = [2, 192], strides = [1, 1]} : vector<2x256xf32> to vector<2x192xf32>
    %135 = arith.negf %134 : vector<2x192xf32>
    %136 = math.exp %135 : vector<2x192xf32>
    %cst_19 = arith.constant 1.000000e+00 : f32
    %137 = vector.broadcast %cst_19 : f32 to vector<2x192xf32>
    %138 = arith.addf %137, %136 : vector<2x192xf32>
    %139 = arith.divf %137, %138 : vector<2x192xf32>
    %140 = vector.extract_strided_slice %133 {offsets = [0, 192], sizes = [2, 64], strides = [1, 1]} : vector<2x256xf32> to vector<2x64xf32>
    %141 = math.tanh %140 : vector<2x64xf32>
    %142 = vector.extract_strided_slice %139 {offsets = [0, 0], sizes = [2, 64], strides = [1, 1]} : vector<2x192xf32> to vector<2x64xf32>
    %143 = vector.extract_strided_slice %139 {offsets = [0, 64], sizes = [2, 64], strides = [1, 1]} : vector<2x192xf32> to vector<2x64xf32>
    %144 = vector.extract_strided_slice %139 {offsets = [0, 128], sizes = [2, 64], strides = [1, 1]} : vector<2x192xf32> to vector<2x64xf32>
    %145 = arith.mulf %143, %107 : vector<2x64xf32>
    %146 = arith.mulf %142, %141 : vector<2x64xf32>
    %147 = arith.addf %145, %146 : vector<2x64xf32>
    %148 = math.tanh %147 : vector<2x64xf32>
    %149 = arith.mulf %144, %148 : vector<2x64xf32>
    %150 = tpu.concatenate %149, %130 in 1 : vector<2x64xf32>, vector<2x64xf32> -> vector<2x128xf32>
    %151 = arith.truncf %150 : vector<2x128xf32> to vector<2x128xbf16>
    %cst_20 = arith.constant dense<0.000000e+00> : vector<2x512xf32>
    %152 = tpu.matmul %151, %0, %cst_20 {dimension_numbers = #tpu.dot_dimension_numbers<[1], [0], [0], [1], [0, 0, 1, 1], [], []>} : vector<2x128xbf16>, vector<128x512xbf16>, vector<2x512xf32> -> vector<2x512xf32>
    %153 = vector.extract_strided_slice %152 {offsets = [0, 256], sizes = [2, 256], strides = [1, 1]} : vector<2x512xf32> to vector<2x256xf32>
    %154 = arith.addf %153, %6 : vector<2x256xf32>
    %155 = vector.extract_strided_slice %154 {offsets = [0, 0], sizes = [2, 192], strides = [1, 1]} : vector<2x256xf32> to vector<2x192xf32>
    %156 = arith.negf %155 : vector<2x192xf32>
    %157 = math.exp %156 : vector<2x192xf32>
    %cst_21 = arith.constant 1.000000e+00 : f32
    %158 = vector.broadcast %cst_21 : f32 to vector<2x192xf32>
    %159 = arith.addf %158, %157 : vector<2x192xf32>
    %160 = arith.divf %158, %159 : vector<2x192xf32>
    %161 = vector.extract_strided_slice %154 {offsets = [0, 192], sizes = [2, 64], strides = [1, 1]} : vector<2x256xf32> to vector<2x64xf32>
    %162 = math.tanh %161 : vector<2x64xf32>
    %163 = vector.extract_strided_slice %160 {offsets = [0, 0], sizes = [2, 64], strides = [1, 1]} : vector<2x192xf32> to vector<2x64xf32>
    %164 = vector.extract_strided_slice %160 {offsets = [0, 64], sizes = [2, 64], strides = [1, 1]} : vector<2x192xf32> to vector<2x64xf32>
    %165 = vector.extract_strided_slice %160 {offsets = [0, 128], sizes = [2, 64], strides = [1, 1]} : vector<2x192xf32> to vector<2x64xf32>
    %166 = arith.mulf %164, %128 : vector<2x64xf32>
    %167 = arith.mulf %163, %162 : vector<2x64xf32>
    %168 = arith.addf %166, %167 : vector<2x64xf32>
    %169 = math.tanh %168 : vector<2x64xf32>
    %170 = arith.mulf %165, %169 : vector<2x64xf32>
    %171 = vector.extract_strided_slice %11 {offsets = [8, 0], sizes = [2, 256], strides = [1, 1]} : vector<16x256xf32> to vector<2x256xf32>
    %172 = vector.extract_strided_slice %152 {offsets = [0, 0], sizes = [2, 256], strides = [1, 1]} : vector<2x512xf32> to vector<2x256xf32>
    %173 = arith.addf %171, %172 : vector<2x256xf32>
    %174 = vector.extract_strided_slice %173 {offsets = [0, 0], sizes = [2, 192], strides = [1, 1]} : vector<2x256xf32> to vector<2x192xf32>
    %175 = arith.negf %174 : vector<2x192xf32>
    %176 = math.exp %175 : vector<2x192xf32>
    %cst_22 = arith.constant 1.000000e+00 : f32
    %177 = vector.broadcast %cst_22 : f32 to vector<2x192xf32>
    %178 = arith.addf %177, %176 : vector<2x192xf32>
    %179 = arith.divf %177, %178 : vector<2x192xf32>
    %180 = vector.extract_strided_slice %173 {offsets = [0, 192], sizes = [2, 64], strides = [1, 1]} : vector<2x256xf32> to vector<2x64xf32>
    %181 = math.tanh %180 : vector<2x64xf32>
    %182 = vector.extract_strided_slice %179 {offsets = [0, 0], sizes = [2, 64], strides = [1, 1]} : vector<2x192xf32> to vector<2x64xf32>
    %183 = vector.extract_strided_slice %179 {offsets = [0, 64], sizes = [2, 64], strides = [1, 1]} : vector<2x192xf32> to vector<2x64xf32>
    %184 = vector.extract_strided_slice %179 {offsets = [0, 128], sizes = [2, 64], strides = [1, 1]} : vector<2x192xf32> to vector<2x64xf32>
    %185 = arith.mulf %183, %147 : vector<2x64xf32>
    %186 = arith.mulf %182, %181 : vector<2x64xf32>
    %187 = arith.addf %185, %186 : vector<2x64xf32>
    %188 = math.tanh %187 : vector<2x64xf32>
    %189 = arith.mulf %184, %188 : vector<2x64xf32>
    %190 = tpu.concatenate %189, %170 in 1 : vector<2x64xf32>, vector<2x64xf32> -> vector<2x128xf32>
    %191 = arith.truncf %190 : vector<2x128xf32> to vector<2x128xbf16>
    %cst_23 = arith.constant dense<0.000000e+00> : vector<2x512xf32>
    %192 = tpu.matmul %191, %0, %cst_23 {dimension_numbers = #tpu.dot_dimension_numbers<[1], [0], [0], [1], [0, 0, 1, 1], [], []>} : vector<2x128xbf16>, vector<128x512xbf16>, vector<2x512xf32> -> vector<2x512xf32>
    %193 = vector.extract_strided_slice %192 {offsets = [0, 256], sizes = [2, 256], strides = [1, 1]} : vector<2x512xf32> to vector<2x256xf32>
    %194 = arith.addf %193, %6 : vector<2x256xf32>
    %195 = vector.extract_strided_slice %194 {offsets = [0, 0], sizes = [2, 192], strides = [1, 1]} : vector<2x256xf32> to vector<2x192xf32>
    %196 = arith.negf %195 : vector<2x192xf32>
    %197 = math.exp %196 : vector<2x192xf32>
    %cst_24 = arith.constant 1.000000e+00 : f32
    %198 = vector.broadcast %cst_24 : f32 to vector<2x192xf32>
    %199 = arith.addf %198, %197 : vector<2x192xf32>
    %200 = arith.divf %198, %199 : vector<2x192xf32>
    %201 = vector.extract_strided_slice %194 {offsets = [0, 192], sizes = [2, 64], strides = [1, 1]} : vector<2x256xf32> to vector<2x64xf32>
    %202 = math.tanh %201 : vector<2x64xf32>
    %203 = vector.extract_strided_slice %200 {offsets = [0, 0], sizes = [2, 64], strides = [1, 1]} : vector<2x192xf32> to vector<2x64xf32>
    %204 = vector.extract_strided_slice %200 {offsets = [0, 64], sizes = [2, 64], strides = [1, 1]} : vector<2x192xf32> to vector<2x64xf32>
    %205 = vector.extract_strided_slice %200 {offsets = [0, 128], sizes = [2, 64], strides = [1, 1]} : vector<2x192xf32> to vector<2x64xf32>
    %206 = arith.mulf %204, %168 : vector<2x64xf32>
    %207 = arith.mulf %203, %202 : vector<2x64xf32>
    %208 = arith.addf %206, %207 : vector<2x64xf32>
    %209 = math.tanh %208 : vector<2x64xf32>
    %210 = arith.mulf %205, %209 : vector<2x64xf32>
    %211 = vector.extract_strided_slice %11 {offsets = [10, 0], sizes = [2, 256], strides = [1, 1]} : vector<16x256xf32> to vector<2x256xf32>
    %212 = vector.extract_strided_slice %192 {offsets = [0, 0], sizes = [2, 256], strides = [1, 1]} : vector<2x512xf32> to vector<2x256xf32>
    %213 = arith.addf %211, %212 : vector<2x256xf32>
    %214 = vector.extract_strided_slice %213 {offsets = [0, 0], sizes = [2, 192], strides = [1, 1]} : vector<2x256xf32> to vector<2x192xf32>
    %215 = arith.negf %214 : vector<2x192xf32>
    %216 = math.exp %215 : vector<2x192xf32>
    %cst_25 = arith.constant 1.000000e+00 : f32
    %217 = vector.broadcast %cst_25 : f32 to vector<2x192xf32>
    %218 = arith.addf %217, %216 : vector<2x192xf32>
    %219 = arith.divf %217, %218 : vector<2x192xf32>
    %220 = vector.extract_strided_slice %213 {offsets = [0, 192], sizes = [2, 64], strides = [1, 1]} : vector<2x256xf32> to vector<2x64xf32>
    %221 = math.tanh %220 : vector<2x64xf32>
    %222 = vector.extract_strided_slice %219 {offsets = [0, 0], sizes = [2, 64], strides = [1, 1]} : vector<2x192xf32> to vector<2x64xf32>
    %223 = vector.extract_strided_slice %219 {offsets = [0, 64], sizes = [2, 64], strides = [1, 1]} : vector<2x192xf32> to vector<2x64xf32>
    %224 = vector.extract_strided_slice %219 {offsets = [0, 128], sizes = [2, 64], strides = [1, 1]} : vector<2x192xf32> to vector<2x64xf32>
    %225 = arith.mulf %223, %187 : vector<2x64xf32>
    %226 = arith.mulf %222, %221 : vector<2x64xf32>
    %227 = arith.addf %225, %226 : vector<2x64xf32>
    %228 = math.tanh %227 : vector<2x64xf32>
    %229 = arith.mulf %224, %228 : vector<2x64xf32>
    %230 = tpu.concatenate %229, %210 in 1 : vector<2x64xf32>, vector<2x64xf32> -> vector<2x128xf32>
    %231 = arith.truncf %230 : vector<2x128xf32> to vector<2x128xbf16>
    %cst_26 = arith.constant dense<0.000000e+00> : vector<2x512xf32>
    %232 = tpu.matmul %231, %0, %cst_26 {dimension_numbers = #tpu.dot_dimension_numbers<[1], [0], [0], [1], [0, 0, 1, 1], [], []>} : vector<2x128xbf16>, vector<128x512xbf16>, vector<2x512xf32> -> vector<2x512xf32>
    %233 = vector.extract_strided_slice %232 {offsets = [0, 256], sizes = [2, 256], strides = [1, 1]} : vector<2x512xf32> to vector<2x256xf32>
    %234 = arith.addf %233, %6 : vector<2x256xf32>
    %235 = vector.extract_strided_slice %234 {offsets = [0, 0], sizes = [2, 192], strides = [1, 1]} : vector<2x256xf32> to vector<2x192xf32>
    %236 = arith.negf %235 : vector<2x192xf32>
    %237 = math.exp %236 : vector<2x192xf32>
    %cst_27 = arith.constant 1.000000e+00 : f32
    %238 = vector.broadcast %cst_27 : f32 to vector<2x192xf32>
    %239 = arith.addf %238, %237 : vector<2x192xf32>
    %240 = arith.divf %238, %239 : vector<2x192xf32>
    %241 = vector.extract_strided_slice %234 {offsets = [0, 192], sizes = [2, 64], strides = [1, 1]} : vector<2x256xf32> to vector<2x64xf32>
    %242 = math.tanh %241 : vector<2x64xf32>
    %243 = vector.extract_strided_slice %240 {offsets = [0, 0], sizes = [2, 64], strides = [1, 1]} : vector<2x192xf32> to vector<2x64xf32>
    %244 = vector.extract_strided_slice %240 {offsets = [0, 64], sizes = [2, 64], strides = [1, 1]} : vector<2x192xf32> to vector<2x64xf32>
    %245 = vector.extract_strided_slice %240 {offsets = [0, 128], sizes = [2, 64], strides = [1, 1]} : vector<2x192xf32> to vector<2x64xf32>
    %246 = arith.mulf %244, %208 : vector<2x64xf32>
    %247 = arith.mulf %243, %242 : vector<2x64xf32>
    %248 = arith.addf %246, %247 : vector<2x64xf32>
    %249 = math.tanh %248 : vector<2x64xf32>
    %250 = arith.mulf %245, %249 : vector<2x64xf32>
    %251 = vector.extract_strided_slice %11 {offsets = [12, 0], sizes = [2, 256], strides = [1, 1]} : vector<16x256xf32> to vector<2x256xf32>
    %252 = vector.extract_strided_slice %232 {offsets = [0, 0], sizes = [2, 256], strides = [1, 1]} : vector<2x512xf32> to vector<2x256xf32>
    %253 = arith.addf %251, %252 : vector<2x256xf32>
    %254 = vector.extract_strided_slice %253 {offsets = [0, 0], sizes = [2, 192], strides = [1, 1]} : vector<2x256xf32> to vector<2x192xf32>
    %255 = arith.negf %254 : vector<2x192xf32>
    %256 = math.exp %255 : vector<2x192xf32>
    %cst_28 = arith.constant 1.000000e+00 : f32
    %257 = vector.broadcast %cst_28 : f32 to vector<2x192xf32>
    %258 = arith.addf %257, %256 : vector<2x192xf32>
    %259 = arith.divf %257, %258 : vector<2x192xf32>
    %260 = vector.extract_strided_slice %253 {offsets = [0, 192], sizes = [2, 64], strides = [1, 1]} : vector<2x256xf32> to vector<2x64xf32>
    %261 = math.tanh %260 : vector<2x64xf32>
    %262 = vector.extract_strided_slice %259 {offsets = [0, 0], sizes = [2, 64], strides = [1, 1]} : vector<2x192xf32> to vector<2x64xf32>
    %263 = vector.extract_strided_slice %259 {offsets = [0, 64], sizes = [2, 64], strides = [1, 1]} : vector<2x192xf32> to vector<2x64xf32>
    %264 = vector.extract_strided_slice %259 {offsets = [0, 128], sizes = [2, 64], strides = [1, 1]} : vector<2x192xf32> to vector<2x64xf32>
    %265 = arith.mulf %263, %227 : vector<2x64xf32>
    %266 = arith.mulf %262, %261 : vector<2x64xf32>
    %267 = arith.addf %265, %266 : vector<2x64xf32>
    %268 = math.tanh %267 : vector<2x64xf32>
    %269 = arith.mulf %264, %268 : vector<2x64xf32>
    %270 = tpu.concatenate %269, %250 in 1 : vector<2x64xf32>, vector<2x64xf32> -> vector<2x128xf32>
    %271 = arith.truncf %270 : vector<2x128xf32> to vector<2x128xbf16>
    %cst_29 = arith.constant dense<0.000000e+00> : vector<2x512xf32>
    %272 = tpu.matmul %271, %0, %cst_29 {dimension_numbers = #tpu.dot_dimension_numbers<[1], [0], [0], [1], [0, 0, 1, 1], [], []>} : vector<2x128xbf16>, vector<128x512xbf16>, vector<2x512xf32> -> vector<2x512xf32>
    %273 = vector.extract_strided_slice %272 {offsets = [0, 256], sizes = [2, 256], strides = [1, 1]} : vector<2x512xf32> to vector<2x256xf32>
    %274 = arith.addf %273, %6 : vector<2x256xf32>
    %275 = vector.extract_strided_slice %274 {offsets = [0, 0], sizes = [2, 192], strides = [1, 1]} : vector<2x256xf32> to vector<2x192xf32>
    %276 = arith.negf %275 : vector<2x192xf32>
    %277 = math.exp %276 : vector<2x192xf32>
    %cst_30 = arith.constant 1.000000e+00 : f32
    %278 = vector.broadcast %cst_30 : f32 to vector<2x192xf32>
    %279 = arith.addf %278, %277 : vector<2x192xf32>
    %280 = arith.divf %278, %279 : vector<2x192xf32>
    %281 = vector.extract_strided_slice %274 {offsets = [0, 192], sizes = [2, 64], strides = [1, 1]} : vector<2x256xf32> to vector<2x64xf32>
    %282 = math.tanh %281 : vector<2x64xf32>
    %283 = vector.extract_strided_slice %280 {offsets = [0, 0], sizes = [2, 64], strides = [1, 1]} : vector<2x192xf32> to vector<2x64xf32>
    %284 = vector.extract_strided_slice %280 {offsets = [0, 64], sizes = [2, 64], strides = [1, 1]} : vector<2x192xf32> to vector<2x64xf32>
    %285 = vector.extract_strided_slice %280 {offsets = [0, 128], sizes = [2, 64], strides = [1, 1]} : vector<2x192xf32> to vector<2x64xf32>
    %286 = arith.mulf %284, %248 : vector<2x64xf32>
    %287 = arith.mulf %283, %282 : vector<2x64xf32>
    %288 = arith.addf %286, %287 : vector<2x64xf32>
    %289 = math.tanh %288 : vector<2x64xf32>
    %290 = arith.mulf %285, %289 : vector<2x64xf32>
    %291 = vector.extract_strided_slice %11 {offsets = [14, 0], sizes = [2, 256], strides = [1, 1]} : vector<16x256xf32> to vector<2x256xf32>
    %292 = vector.extract_strided_slice %272 {offsets = [0, 0], sizes = [2, 256], strides = [1, 1]} : vector<2x512xf32> to vector<2x256xf32>
    %293 = arith.addf %291, %292 : vector<2x256xf32>
    %294 = vector.extract_strided_slice %293 {offsets = [0, 0], sizes = [2, 192], strides = [1, 1]} : vector<2x256xf32> to vector<2x192xf32>
    %295 = arith.negf %294 : vector<2x192xf32>
    %296 = math.exp %295 : vector<2x192xf32>
    %cst_31 = arith.constant 1.000000e+00 : f32
    %297 = vector.broadcast %cst_31 : f32 to vector<2x192xf32>
    %298 = arith.addf %297, %296 : vector<2x192xf32>
    %299 = arith.divf %297, %298 : vector<2x192xf32>
    %300 = vector.extract_strided_slice %293 {offsets = [0, 192], sizes = [2, 64], strides = [1, 1]} : vector<2x256xf32> to vector<2x64xf32>
    %301 = math.tanh %300 : vector<2x64xf32>
    %302 = vector.extract_strided_slice %299 {offsets = [0, 0], sizes = [2, 64], strides = [1, 1]} : vector<2x192xf32> to vector<2x64xf32>
    %303 = vector.extract_strided_slice %299 {offsets = [0, 64], sizes = [2, 64], strides = [1, 1]} : vector<2x192xf32> to vector<2x64xf32>
    %304 = vector.extract_strided_slice %299 {offsets = [0, 128], sizes = [2, 64], strides = [1, 1]} : vector<2x192xf32> to vector<2x64xf32>
    %305 = arith.mulf %303, %267 : vector<2x64xf32>
    %306 = arith.mulf %302, %301 : vector<2x64xf32>
    %307 = arith.addf %305, %306 : vector<2x64xf32>
    %308 = math.tanh %307 : vector<2x64xf32>
    %309 = arith.mulf %304, %308 : vector<2x64xf32>
    %310 = tpu.concatenate %309, %290 in 1 : vector<2x64xf32>, vector<2x64xf32> -> vector<2x128xf32>
    %311 = arith.truncf %310 : vector<2x128xf32> to vector<2x128xbf16>
    %cst_32 = arith.constant dense<0.000000e+00> : vector<2x512xf32>
    %312 = tpu.matmul %311, %0, %cst_32 {dimension_numbers = #tpu.dot_dimension_numbers<[1], [0], [0], [1], [0, 0, 1, 1], [], []>} : vector<2x128xbf16>, vector<128x512xbf16>, vector<2x512xf32> -> vector<2x512xf32>
    %313 = vector.extract_strided_slice %312 {offsets = [0, 256], sizes = [2, 256], strides = [1, 1]} : vector<2x512xf32> to vector<2x256xf32>
    %314 = arith.addf %313, %6 : vector<2x256xf32>
    %315 = vector.extract_strided_slice %314 {offsets = [0, 0], sizes = [2, 192], strides = [1, 1]} : vector<2x256xf32> to vector<2x192xf32>
    %316 = arith.negf %315 : vector<2x192xf32>
    %317 = math.exp %316 : vector<2x192xf32>
    %cst_33 = arith.constant 1.000000e+00 : f32
    %318 = vector.broadcast %cst_33 : f32 to vector<2x192xf32>
    %319 = arith.addf %318, %317 : vector<2x192xf32>
    %320 = arith.divf %318, %319 : vector<2x192xf32>
    %321 = vector.extract_strided_slice %314 {offsets = [0, 192], sizes = [2, 64], strides = [1, 1]} : vector<2x256xf32> to vector<2x64xf32>
    %322 = math.tanh %321 : vector<2x64xf32>
    %323 = vector.extract_strided_slice %320 {offsets = [0, 0], sizes = [2, 64], strides = [1, 1]} : vector<2x192xf32> to vector<2x64xf32>
    %324 = vector.extract_strided_slice %320 {offsets = [0, 64], sizes = [2, 64], strides = [1, 1]} : vector<2x192xf32> to vector<2x64xf32>
    %325 = vector.extract_strided_slice %320 {offsets = [0, 128], sizes = [2, 64], strides = [1, 1]} : vector<2x192xf32> to vector<2x64xf32>
    %326 = arith.mulf %324, %288 : vector<2x64xf32>
    %327 = arith.mulf %323, %322 : vector<2x64xf32>
    %328 = arith.addf %326, %327 : vector<2x64xf32>
    %329 = math.tanh %328 : vector<2x64xf32>
    %330 = arith.mulf %325, %329 : vector<2x64xf32>
    %331 = arith.truncf %330 : vector<2x64xf32> to vector<2x64xbf16>
    %cst_34 = arith.constant dense<0.000000e+00> : vector<2x4xf32>
    %332 = tpu.matmul %331, %2, %cst_34 {dimension_numbers = #tpu.dot_dimension_numbers<[1], [0], [0], [1], [0, 0, 1, 1], [], []>} : vector<2x64xbf16>, vector<64x4xbf16>, vector<2x4xf32> -> vector<2x4xf32>
    %333 = vector.broadcast %7 : vector<1x4xf32> to vector<2x4xf32>
    %334 = arith.addf %332, %333 : vector<2x4xf32>
    %c0_35 = arith.constant 0 : index
    %c0_36 = arith.constant 0 : index
    %335 = vector.load %arg3[%c0_35, %c0_36] : memref<2x4xf32, #tpu.memory_space<vmem>>, vector<2x4xf32>
    tpu.vector_store %arg3[%c0_35, %c0_36], %334 {strides = array<i32>} : memref<2x4xf32, #tpu.memory_space<vmem>>, vector<2x4xf32>,
    return
  }
}

</mosaic_0001>

<llo_original>
// kernel: lstm_online_model_forward.1
$region0: #{lstm_online_model_forward.1}
  #allocation0 [shape = 'u32[]', space=smem, size = 0x4, offset = 0x4, fixed_abs, tag = 'smem constant byte address 0x4 - core index']
  #allocation1 [shape = 'u32[72,128]{1,0:T(1,128)}', space=vmem, size = 0x9000, scoped, tag = 'internal scratch']
  %s0 = inlined_call_operand.vmem [shape: bf16[16,8], index: 0, kind: input, shape index: {}]
  %s1 = inlined_call_operand.hbm [shape: bf16[200,512], index: 1, kind: input, shape index: {}]
  %s2 = inlined_call_operand.vmem [shape: f32[3,256], index: 2, kind: input, shape index: {}]
  %s3 = inlined_call_operand.hbm [shape: f32[2,4], index: 3, kind: output, shape index: {}]
  %s4 = sld [smem:[#allocation0]]
  $region26: #{lstm_online_model_forward.1} parent=0
    _
  %s6 = ssub.s32 1, %s4
  %s7 = scalar_select 0, %s6, %s4
  $region1: #{lstm_online_model_forward.1} parent=0
    #allocation2 [shape = 'u8[204800]{0}', space=vmem, size = 0x32000, scoped, tag = 'input window, operand 1, single buffered']
    #allocation3 [shape = 's32[1]{0}', space=sflag, size = 0x4, scoped, tag = 'scoped memory for lstm_online_model_forward.1']
    #allocation4 [shape = 's32[1]{0}', space=sflag, size = 0x4, scoped, tag = 'scoped memory for lstm_online_model_forward.1']
    #allocation5 [shape = 'u8[1024]{0}', space=vmem, size = 0x400, scoped, tag = 'output window, operand 0, single buffered']
    %8 = vsyncpa [#allocation3], 0
    %9 = vsyncpa [#allocation4], 0
    // Predicated region
    $region2: #{lstm_online_model_forward.1} parent=1 // pred_check
      _
    $region3: #{lstm_online_model_forward.1} parent=1 // pred_check_branch
      %11 = sbr.rel (0) target = $region5
    $region4: #{lstm_online_model_forward.1} parent=1 // pred_region
      _
    $region5: #{lstm_online_model_forward.1} parent=1 // pred_fallthru
      _
    // Predicated region
    $region6: #{lstm_online_model_forward.1} parent=1 // pred_check
      _
    $region7: #{lstm_online_model_forward.1} parent=1 // pred_check_branch
      %13 = sbr.rel (0) target = $region9
    $region8: #{lstm_online_model_forward.1} parent=1 // pred_region
      %15 = vsyncadd [#allocation3], 0
      %s16 = sshll.u32 %s1, 4
      %s17 = int_to_ptr.hbm [resolvable:$true] %s16
      %s18 = sshll.u32 [#allocation2], 4
      %s19 = int_to_ptr.vmem [resolvable:$true] %s18
      %24 = dma.hbm_to_vmem [thread:$0]  %s17, 6400, %s19, [#allocation3], 256, 256, 16
    $region9: #{lstm_online_model_forward.1} parent=1 // pred_fallthru
      _
    // Predicated region
    $region10: #{lstm_online_model_forward.1} parent=1 // pred_check
      _
    $region11: #{lstm_online_model_forward.1} parent=1 // pred_check_branch
      %26 = sbr.rel (0) target = $region13
    $region12: #{lstm_online_model_forward.1} parent=1 // pred_region
      _
    $region13: #{lstm_online_model_forward.1} parent=1 // pred_fallthru
      _
    // Predicated region
    $region14: #{lstm_online_model_forward.1} parent=1 // pred_check
      _
    $region15: #{lstm_online_model_forward.1} parent=1 // pred_check_branch
      %28 = sbr.rel (0) target = $region17
    $region16: #{lstm_online_model_forward.1} parent=1 // pred_region
      %30 = dma.done [#allocation3], 6400
    $region17: #{lstm_online_model_forward.1} parent=1 // pred_fallthru
      _
    %v32 = vld [vmem:[#allocation2] sm:$0xff]
    %v33 = vld [vmem:[#allocation2 + $0x8] sm:$0xff]
    %v34 = vld [vmem:[#allocation2 + $0x10] sm:$0xff]
    %v35 = vld [vmem:[#allocation2 + $0x18] sm:$0xff]
    %v36 = vld [vmem:[#allocation2 + $0x20] sm:$0xff]
    %v37 = vld [vmem:[#allocation2 + $0x28] sm:$0xff]
    %v38 = vld [vmem:[#allocation2 + $0x30] sm:$0xff]
    %v39 = vld [vmem:[#allocation2 + $0x38] sm:$0xff]
    %v40 = vld [vmem:[#allocation2 + $0x40] sm:$0xff]
    %v41 = vld [vmem:[#allocation2 + $0x48] sm:$0xff]
    %v42 = vld [vmem:[#allocation2 + $0x50] sm:$0xff]
    %v43 = vld [vmem:[#allocation2 + $0x58] sm:$0xff]
    %v44 = vld [vmem:[#allocation2 + $0x60] sm:$0xff]
    %v45 = vld [vmem:[#allocation2 + $0x68] sm:$0xff]
    %v46 = vld [vmem:[#allocation2 + $0x70] sm:$0xff]
    %v47 = vld [vmem:[#allocation2 + $0x78] sm:$0xff]
    %v48 = vld [vmem:[#allocation2 + $0x80] sm:$0xff]
    %v49 = vld [vmem:[#allocation2 + $0x88] sm:$0xff]
    %v50 = vld [vmem:[#allocation2 + $0x90] sm:$0xff]
    %v51 = vld [vmem:[#allocation2 + $0x98] sm:$0xff]
    %v52 = vld [vmem:[#allocation2 + $0xa0] sm:$0xff]
    %v53 = vld [vmem:[#allocation2 + $0xa8] sm:$0xff]
    %v54 = vld [vmem:[#allocation2 + $0xb0] sm:$0xff]
    %v55 = vld [vmem:[#allocation2 + $0xb8] sm:$0xff]
    %v56 = vld [vmem:[#allocation2 + $0xc0] sm:$0xff]
    %v57 = vld [vmem:[#allocation2 + $0xc8] sm:$0xff]
    %v58 = vld [vmem:[#allocation2 + $0xd0] sm:$0xff]
    %v59 = vld [vmem:[#allocation2 + $0xd8] sm:$0xff]
    %v60 = vld [vmem:[#allocation2 + $0xe0] sm:$0xff]
    %v61 = vld [vmem:[#allocation2 + $0xe8] sm:$0xff]
    %v62 = vld [vmem:[#allocation2 + $0xf0] sm:$0xff]
    %v63 = vld [vmem:[#allocation2 + $0xf8] sm:$0xff]
    %v64 = vld [vmem:[#allocation2 + $0x100] sm:$0xff]
    %v65 = vld [vmem:[#allocation2 + $0x110] sm:$0xf]
    %v66 = vld [vmem:[#allocation2 + $0x120] sm:$0xf]
    %v67 = vld [vmem:[#allocation2 + $0x130] sm:$0xf]
    %v68 = vld [vmem:[#allocation2 + $0x140] sm:$0xf]
    %v69 = vld [vmem:[#allocation2 + $0x150] sm:$0xf]
    %v70 = vld [vmem:[#allocation2 + $0x160] sm:$0xf]
    %v71 = vld [vmem:[#allocation2 + $0x170] sm:$0xf]
    %v72 = vld [vmem:[#allocation2 + $0x180] sm:$0xf]
    %v73 = vld [vmem:[%s2] ss:$4 sm:$0x3]
    %s74 = scalar_lea.vmem %s2, 1
    %v75 = vld [vmem:[%s74] ss:$4 sm:$0x3]
    %v77 = vperm.slane %v75, 0
    %v78 = vperm.slane %v75, 1
    %v81 = vld [vmem:[%s2 + $0x2] sm:$0x1]
    %v82 = vld [vmem:[%s0] sm:$0xf]
    %v83 = vld [vmem:[%s0 + $0x4] sm:$0xf]
    %v85 = vperm.slane %v73, 0
    %v86 = vperm.slane %v73, 1
    %v91 = vunpack.c.l.b16 %v82
    %v92 = vunpack.c.l.b16 %v83
    %v93 = vpack.c.b16 %v92, %v91
    %v95 = vunpack.c.l.b16 %v64
    %v96 = vunpack.c.h.b16 %v64
    %v97 = vpack.c.b16 %v95, %v95
    %v98 = vpack.c.b16 %v96, %v96
    %vm99 = vcmask 64512
    %v101 = vsel %vm99, %v93, 0
    %vm103 = vcmask 1043456
    %v105 = vsel %vm103, %v97, 0
    %v108 = vsel %vm103, %v98, 0
    %110 = vmatpush.bf16.msra.mxu0 0
    %111 = vmatpush.bf16.msra.mxu0 0
    %112 = vmatpush.bf16.msra.mxu0 0
    %113 = vmatpush.bf16.msra.mxu0 0
    %114 = vmatpush.bf16.msra.mxu0 0
    %115 = vmatpush.bf16.msra.mxu0 0
    %116 = vmatpush.bf16.msra.mxu0 0
    %117 = vmatpush.bf16.msra.mxu0 %v105
    %118 = vmatmul.bf16.gmra.mxu0 %v101
    %v119 = vpop.f32.mrf.mxu0
    %v120 = vadd.f32 %v85, %v119
    %v121 = vpop.f32.mrf.mxu0
    %v122 = vadd.f32 %v85, %v121
    %123 = vdwg.mxu0
    %124 = vmatpush.bf16.msra.mxu0 0
    %125 = vmatpush.bf16.msra.mxu0 0
    %126 = vmatpush.bf16.msra.mxu0 0
    %127 = vmatpush.bf16.msra.mxu0 0
    %128 = vmatpush.bf16.msra.mxu0 0
    %129 = vmatpush.bf16.msra.mxu0 0
    %130 = vmatpush.bf16.msra.mxu0 0
    %131 = vmatpush.bf16.msra.mxu0 %v108
    %132 = vmatmul.bf16.gmra.mxu0 %v101
    %v133 = vpop.f32.mrf.mxu0
    %v134 = vadd.f32 %v86, %v133
    %v135 = vpop.f32.mrf.mxu0
    %v136 = vadd.f32 %v86, %v135
    %137 = vdwg.mxu0
    %v138 = vxor.u32 %v120, 2147483648
    %v139 = vxor.u32 %v134, 2147483648
    %v140 = vmul.f32 %v138, 1.442695
    %v141 = vpow.pop %v140
    %v142 = vmul.f32 %v139, 1.442695
    %v143 = vpow.pop %v142
    %v144 = vadd.f32 %v141, 1.0
    %v145 = vadd.f32 %v143, 1.0
    %v146 = vrcp.pop %v144
    %v147 = vmul.f32 %v144, %v146
    %v148 = vsub.f32 1.0, %v147
    %v149 = vmul.f32 %v146, %v148
    %v150 = vadd.f32 %v146, %v149
    %vm151 = vweird.f32 %v144
    %vm152 = vweird.f32 %v146
    %vm153 = vmor %vm151, %vm152
    %v154 = vsel %vm153, %v146, %v150
    %v155 = vand.u32 2147483647, %v144
    %vm156 = vcmp.eq.f32.partialorder %v155, 8.507059e+37
    %v157 = vand.u32 %v144, 2147483648
    %v158 = vor.u32 1.1754944e-38, %v157
    %v159 = vsel %vm156, %v158, %v154
    %v160 = vmul.f32 1.0, %v159
    %v161 = vrcp.pop %v145
    %v162 = vmul.f32 %v145, %v161
    %v163 = vsub.f32 1.0, %v162
    %v164 = vmul.f32 %v161, %v163
    %v165 = vadd.f32 %v161, %v164
    %vm166 = vweird.f32 %v145
    %vm167 = vweird.f32 %v161
    %vm168 = vmor %vm166, %vm167
    %v169 = vsel %vm168, %v161, %v165
    %v170 = vand.u32 2147483647, %v145
    %vm171 = vcmp.eq.f32.partialorder %v170, 8.507059e+37
    %v172 = vand.u32 %v145, 2147483648
    %v173 = vor.u32 1.1754944e-38, %v172
    %v174 = vsel %vm171, %v173, %v169
    %v175 = vmul.f32 1.0, %v174
    %v176 = vtanh.pop %v134
    %v177 = vmul.f32 %v160, 0.0
    %179 = vrot.lane.b32.xlu0 %v176, 64
    %v180 = vpop.permute.xlu0 %179
    %v182 = vmul.f32 %v160, %v180
    %184 = vrot.lane.b32.xlu0 %v182, 64
    %v185 = vpop.permute.xlu0 %184
    %v187 = vadd.f32 %v177, %v185
    %v188 = vtanh.pop %v187
    %190 = vrot.lane.b32.xlu0 %v188, 64
    %v191 = vpop.permute.xlu0 %190
    %v193 = vmul.f32 %v175, %v191
    %vm194 = vcmask 523264
    %v195 = vsel %vm194, %v193, 0.0
    %v196 = vpack.c.bf16 %v195, %v195
    %v229 = vunpack.c.l.b16 %v32
    %v230 = vunpack.c.h.b16 %v32
    %v231 = vunpack.c.l.b16 %v33
    %v232 = vunpack.c.h.b16 %v33
    %v233 = vunpack.c.l.b16 %v34
    %v234 = vunpack.c.h.b16 %v34
    %v235 = vunpack.c.l.b16 %v35
    %v236 = vunpack.c.h.b16 %v35
    %v237 = vunpack.c.l.b16 %v36
    %v238 = vunpack.c.h.b16 %v36
    %v239 = vunpack.c.l.b16 %v37
    %v240 = vunpack.c.h.b16 %v37
    %v241 = vunpack.c.l.b16 %v38
    %v242 = vunpack.c.h.b16 %v38
    %v243 = vunpack.c.l.b16 %v39
    %v244 = vunpack.c.h.b16 %v39
    %v245 = vunpack.c.l.b16 %v40
    %v246 = vunpack.c.h.b16 %v40
    %v247 = vunpack.c.l.b16 %v41
    %v248 = vunpack.c.h.b16 %v41
    %v249 = vunpack.c.l.b16 %v42
    %v250 = vunpack.c.h.b16 %v42
    %v251 = vunpack.c.l.b16 %v43
    %v252 = vunpack.c.h.b16 %v43
    %v253 = vunpack.c.l.b16 %v44
    %v254 = vunpack.c.h.b16 %v44
    %v255 = vunpack.c.l.b16 %v45
    %v256 = vunpack.c.h.b16 %v45
    %v257 = vunpack.c.l.b16 %v46
    %v258 = vunpack.c.h.b16 %v46
    %v259 = vunpack.c.l.b16 %v47
    %v260 = vunpack.c.h.b16 %v47
    %v261 = vunpack.c.l.b16 %v48
    %v262 = vunpack.c.h.b16 %v48
    %v263 = vunpack.c.l.b16 %v49
    %v264 = vunpack.c.h.b16 %v49
    %v265 = vunpack.c.l.b16 %v50
    %v266 = vunpack.c.h.b16 %v50
    %v267 = vunpack.c.l.b16 %v51
    %v268 = vunpack.c.h.b16 %v51
    %v269 = vunpack.c.l.b16 %v52
    %v270 = vunpack.c.h.b16 %v52
    %v271 = vunpack.c.l.b16 %v53
    %v272 = vunpack.c.h.b16 %v53
    %v273 = vunpack.c.l.b16 %v54
    %v274 = vunpack.c.h.b16 %v54
    %v275 = vunpack.c.l.b16 %v55
    %v276 = vunpack.c.h.b16 %v55
    %v277 = vunpack.c.l.b16 %v56
    %v278 = vunpack.c.h.b16 %v56
    %v279 = vunpack.c.l.b16 %v57
    %v280 = vunpack.c.h.b16 %v57
    %v281 = vunpack.c.l.b16 %v58
    %v282 = vunpack.c.h.b16 %v58
    %v283 = vunpack.c.l.b16 %v59
    %v284 = vunpack.c.h.b16 %v59
    %v285 = vunpack.c.l.b16 %v60
    %v286 = vunpack.c.h.b16 %v60
    %v287 = vunpack.c.l.b16 %v61
    %v288 = vunpack.c.h.b16 %v61
    %v289 = vunpack.c.l.b16 %v62
    %v290 = vunpack.c.h.b16 %v62
    %v291 = vunpack.c.l.b16 %v63
    %v292 = vunpack.c.h.b16 %v63
    %v293 = vpack.c.b16 %v233, %v229
    %v294 = vpack.c.b16 %v234, %v230
    %v295 = vpack.c.b16 %v235, %v231
    %v296 = vpack.c.b16 %v236, %v232
    %v297 = vpack.c.b16 %v241, %v237
    %v298 = vpack.c.b16 %v242, %v238
    %v299 = vpack.c.b16 %v243, %v239
    %v300 = vpack.c.b16 %v244, %v240
    %v301 = vpack.c.b16 %v249, %v245
    %v302 = vpack.c.b16 %v250, %v246
    %v303 = vpack.c.b16 %v251, %v247
    %v304 = vpack.c.b16 %v252, %v248
    %v305 = vpack.c.b16 %v257, %v253
    %v306 = vpack.c.b16 %v258, %v254
    %v307 = vpack.c.b16 %v259, %v255
    %v308 = vpack.c.b16 %v260, %v256
    %v309 = vpack.c.b16 %v265, %v261
    %v310 = vpack.c.b16 %v266, %v262
    %v311 = vpack.c.b16 %v267, %v263
    %v312 = vpack.c.b16 %v268, %v264
    %v313 = vpack.c.b16 %v273, %v269
    %v314 = vpack.c.b16 %v274, %v270
    %v315 = vpack.c.b16 %v275, %v271
    %v316 = vpack.c.b16 %v276, %v272
    %v317 = vpack.c.b16 %v281, %v277
    %v318 = vpack.c.b16 %v282, %v278
    %v319 = vpack.c.b16 %v283, %v279
    %v320 = vpack.c.b16 %v284, %v280
    %v321 = vpack.c.b16 %v289, %v285
    %v322 = vpack.c.b16 %v290, %v286
    %v323 = vpack.c.b16 %v291, %v287
    %v324 = vpack.c.b16 %v292, %v288
    %357 = vmatpush.bf16.msra.mxu0 %v321
    %358 = vmatpush.bf16.msra.mxu0 %v317
    %359 = vmatpush.bf16.msra.mxu0 %v313
    %360 = vmatpush.bf16.msra.mxu0 %v309
    %361 = vmatpush.bf16.msra.mxu0 %v305
    %362 = vmatpush.bf16.msra.mxu0 %v301
    %363 = vmatpush.bf16.msra.mxu0 %v297
    %364 = vmatpush.bf16.msra.mxu0 %v293
    %365 = vmatmul.bf16.gmra.mxu0 %v196
    %v366 = vpop.f32.mrf.mxu0
    %v367 = vadd.f32 0.0, %v366
    %v368 = vpop.f32.mrf.mxu0
    %369 = vdwg.mxu0
    %370 = vmatpush.bf16.msra.mxu0 %v322
    %371 = vmatpush.bf16.msra.mxu0 %v318
    %372 = vmatpush.bf16.msra.mxu0 %v314
    %373 = vmatpush.bf16.msra.mxu0 %v310
    %374 = vmatpush.bf16.msra.mxu0 %v306
    %375 = vmatpush.bf16.msra.mxu0 %v302
    %376 = vmatpush.bf16.msra.mxu0 %v298
    %377 = vmatpush.bf16.msra.mxu0 %v294
    %378 = vmatmul.bf16.gmra.mxu0 %v196
    %v379 = vpop.f32.mrf.mxu0
    %v380 = vadd.f32 0.0, %v379
    %v381 = vpop.f32.mrf.mxu0
    %382 = vdwg.mxu0
    %383 = vmatpush.bf16.msra.mxu0 %v323
    %384 = vmatpush.bf16.msra.mxu0 %v319
    %385 = vmatpush.bf16.msra.mxu0 %v315
    %386 = vmatpush.bf16.msra.mxu0 %v311
    %387 = vmatpush.bf16.msra.mxu0 %v307
    %388 = vmatpush.bf16.msra.mxu0 %v303
    %389 = vmatpush.bf16.msra.mxu0 %v299
    %390 = vmatpush.bf16.msra.mxu0 %v295
    %391 = vmatmul.bf16.gmra.mxu0 %v196
    %v392 = vpop.f32.mrf.mxu0
    %v393 = vadd.f32 0.0, %v392
    %v394 = vpop.f32.mrf.mxu0
    %395 = vdwg.mxu0
    %396 = vmatpush.bf16.msra.mxu0 %v324
    %397 = vmatpush.bf16.msra.mxu0 %v320
    %398 = vmatpush.bf16.msra.mxu0 %v316
    %399 = vmatpush.bf16.msra.mxu0 %v312
    %400 = vmatpush.bf16.msra.mxu0 %v308
    %401 = vmatpush.bf16.msra.mxu0 %v304
    %402 = vmatpush.bf16.msra.mxu0 %v300
    %403 = vmatpush.bf16.msra.mxu0 %v296
    %404 = vmatmul.bf16.gmra.mxu0 %v196
    %v405 = vpop.f32.mrf.mxu0
    %v406 = vadd.f32 0.0, %v405
    %v407 = vpop.f32.mrf.mxu0
    %408 = vdwg.mxu0
    %v409 = vadd.f32 %v393, %v77
    %v410 = vadd.f32 %v406, %v78
    %v411 = vxor.u32 %v409, 2147483648
    %v412 = vxor.u32 %v410, 2147483648
    %v413 = vmul.f32 %v411, 1.442695
    %v414 = vpow.pop %v413
    %v415 = vmul.f32 %v412, 1.442695
    %v416 = vpow.pop %v415
    %v417 = vadd.f32 %v414, 1.0
    %v418 = vadd.f32 %v416, 1.0
    %v419 = vrcp.pop %v417
    %v420 = vmul.f32 %v417, %v419
    %v421 = vsub.f32 1.0, %v420
    %v422 = vmul.f32 %v419, %v421
    %v423 = vadd.f32 %v419, %v422
    %vm424 = vweird.f32 %v417
    %vm425 = vweird.f32 %v419
    %vm426 = vmor %vm424, %vm425
    %v427 = vsel %vm426, %v419, %v423
    %v428 = vand.u32 2147483647, %v417
    %vm429 = vcmp.eq.f32.partialorder %v428, 8.507059e+37
    %v430 = vand.u32 %v417, 2147483648
    %v431 = vor.u32 1.1754944e-38, %v430
    %v432 = vsel %vm429, %v431, %v427
    %v433 = vmul.f32 1.0, %v432
    %v434 = vrcp.pop %v418
    %v435 = vmul.f32 %v418, %v434
    %v436 = vsub.f32 1.0, %v435
    %v437 = vmul.f32 %v434, %v436
    %v438 = vadd.f32 %v434, %v437
    %vm439 = vweird.f32 %v418
    %vm440 = vweird.f32 %v434
    %vm441 = vmor %vm439, %vm440
    %v442 = vsel %vm441, %v434, %v438
    %v443 = vand.u32 2147483647, %v418
    %vm444 = vcmp.eq.f32.partialorder %v443, 8.507059e+37
    %v445 = vand.u32 %v418, 2147483648
    %v446 = vor.u32 1.1754944e-38, %v445
    %v447 = vsel %vm444, %v446, %v442
    %v448 = vmul.f32 1.0, %v447
    %v449 = vtanh.pop %v410
    %v450 = vmul.f32 %v433, 0.0
    %452 = vrot.lane.b32.xlu0 %v449, 64
    %v453 = vpop.permute.xlu0 %452
    %v455 = vmul.f32 %v433, %v453
    %457 = vrot.lane.b32.xlu0 %v455, 64
    %v458 = vpop.permute.xlu0 %457
    %v460 = vadd.f32 %v450, %v458
    %v461 = vtanh.pop %v460
    %463 = vrot.lane.b32.xlu0 %v461, 64
    %v464 = vpop.permute.xlu0 %463
    %v466 = vmul.f32 %v448, %v464
    %v469 = vrot.slane %v367, 6
    %v470 = vrot.slane %v380, 6
    %v473 = vadd.f32 %v120, %v469
    %v474 = vadd.f32 %v134, %v470
    %v475 = vxor.u32 %v473, 2147483648
    %v476 = vxor.u32 %v474, 2147483648
    %v477 = vmul.f32 %v475, 1.442695
    %v478 = vpow.pop %v477
    %v479 = vmul.f32 %v476, 1.442695
    %v480 = vpow.pop %v479
    %v481 = vadd.f32 %v478, 1.0
    %v482 = vadd.f32 %v480, 1.0
    %v483 = vrcp.pop %v481
    %v484 = vmul.f32 %v481, %v483
    %v485 = vsub.f32 1.0, %v484
    %v486 = vmul.f32 %v483, %v485
    %v487 = vadd.f32 %v483, %v486
    %vm488 = vweird.f32 %v481
    %vm489 = vweird.f32 %v483
    %vm490 = vmor %vm488, %vm489
    %v491 = vsel %vm490, %v483, %v487
    %v492 = vand.u32 2147483647, %v481
    %vm493 = vcmp.eq.f32.partialorder %v492, 8.507059e+37
    %v494 = vand.u32 %v481, 2147483648
    %v495 = vor.u32 1.1754944e-38, %v494
    %v496 = vsel %vm493, %v495, %v491
    %v497 = vmul.f32 1.0, %v496
    %v498 = vrcp.pop %v482
    %v499 = vmul.f32 %v482, %v498
    %v500 = vsub.f32 1.0, %v499
    %v501 = vmul.f32 %v498, %v500
    %v502 = vadd.f32 %v498, %v501
    %vm503 = vweird.f32 %v482
    %vm504 = vweird.f32 %v498
    %vm505 = vmor %vm503, %vm504
    %v506 = vsel %vm505, %v498, %v502
    %v507 = vand.u32 2147483647, %v482
    %vm508 = vcmp.eq.f32.partialorder %v507, 8.507059e+37
    %v509 = vand.u32 %v482, 2147483648
    %v510 = vor.u32 1.1754944e-38, %v509
    %v511 = vsel %vm508, %v510, %v506
    %v512 = vmul.f32 1.0, %v511
    %v513 = vtanh.pop %v474
    %v515 = vrot.slane %v187, 6
    %v517 = vmul.f32 %v497, %v515
    %519 = vrot.lane.b32.xlu0 %v513, 64
    %v520 = vpop.permute.xlu0 %519
    %v522 = vmul.f32 %v497, %v520
    %524 = vrot.lane.b32.xlu0 %v522, 64
    %v525 = vpop.permute.xlu0 %524
    %v527 = vadd.f32 %v517, %v525
    %v528 = vtanh.pop %v527
    %530 = vrot.lane.b32.xlu0 %v528, 64
    %v531 = vpop.permute.xlu0 %530
    %v533 = vmul.f32 %v512, %v531
    %v535 = vrot.slane %v466, 6
    %536 = vrot.lane.b32.xlu0 %v535, 64
    %v537 = vpop.permute.xlu0 %536
    %v539 = vsel %vm194, %v533, %v537
    %v540 = vpack.c.bf16 %v539, %v539
    %v542 = vrot.slane %v540, 1
    %544 = vmatpush.bf16.msra.mxu0 %v321
    %545 = vmatpush.bf16.msra.mxu0 %v317
    %546 = vmatpush.bf16.msra.mxu0 %v313
    %547 = vmatpush.bf16.msra.mxu0 %v309
    %548 = vmatpush.bf16.msra.mxu0 %v305
    %549 = vmatpush.bf16.msra.mxu0 %v301
    %550 = vmatpush.bf16.msra.mxu0 %v297
    %551 = vmatpush.bf16.msra.mxu0 %v293
    %552 = vmatmul.bf16.gmra.mxu0 %v542
    %v553 = vpop.f32.mrf.mxu0
    %v554 = vadd.f32 0.0, %v553
    %v555 = vpop.f32.mrf.mxu0
    %556 = vdwg.mxu0
    %557 = vmatpush.bf16.msra.mxu0 %v322
    %558 = vmatpush.bf16.msra.mxu0 %v318
    %559 = vmatpush.bf16.msra.mxu0 %v314
    %560 = vmatpush.bf16.msra.mxu0 %v310
    %561 = vmatpush.bf16.msra.mxu0 %v306
    %562 = vmatpush.bf16.msra.mxu0 %v302
    %563 = vmatpush.bf16.msra.mxu0 %v298
    %564 = vmatpush.bf16.msra.mxu0 %v294
    %565 = vmatmul.bf16.gmra.mxu0 %v542
    %v566 = vpop.f32.mrf.mxu0
    %v567 = vadd.f32 0.0, %v566
    %v568 = vpop.f32.mrf.mxu0
    %569 = vdwg.mxu0
    %570 = vmatpush.bf16.msra.mxu0 %v323
    %571 = vmatpush.bf16.msra.mxu0 %v319
    %572 = vmatpush.bf16.msra.mxu0 %v315
    %573 = vmatpush.bf16.msra.mxu0 %v311
    %574 = vmatpush.bf16.msra.mxu0 %v307
    %575 = vmatpush.bf16.msra.mxu0 %v303
    %576 = vmatpush.bf16.msra.mxu0 %v299
    %577 = vmatpush.bf16.msra.mxu0 %v295
    %578 = vmatmul.bf16.gmra.mxu0 %v542
    %v579 = vpop.f32.mrf.mxu0
    %v580 = vadd.f32 0.0, %v579
    %v581 = vpop.f32.mrf.mxu0
    %582 = vdwg.mxu0
    %583 = vmatpush.bf16.msra.mxu0 %v324
    %584 = vmatpush.bf16.msra.mxu0 %v320
    %585 = vmatpush.bf16.msra.mxu0 %v316
    %586 = vmatpush.bf16.msra.mxu0 %v312
    %587 = vmatpush.bf16.msra.mxu0 %v308
    %588 = vmatpush.bf16.msra.mxu0 %v304
    %589 = vmatpush.bf16.msra.mxu0 %v300
    %590 = vmatpush.bf16.msra.mxu0 %v296
    %591 = vmatmul.bf16.gmra.mxu0 %v542
    %v592 = vpop.f32.mrf.mxu0
    %v593 = vadd.f32 0.0, %v592
    %v594 = vpop.f32.mrf.mxu0
    %595 = vdwg.mxu0
    %v596 = vadd.f32 %v580, %v77
    %v597 = vadd.f32 %v593, %v78
    %v598 = vxor.u32 %v596, 2147483648
    %v599 = vxor.u32 %v597, 2147483648
    %v600 = vmul.f32 %v598, 1.442695
    %v601 = vpow.pop %v600
    %v602 = vmul.f32 %v599, 1.442695
    %v603 = vpow.pop %v602
    %v604 = vadd.f32 %v601, 1.0
    %v605 = vadd.f32 %v603, 1.0
    %v606 = vrcp.pop %v604
    %v607 = vmul.f32 %v604, %v606
    %v608 = vsub.f32 1.0, %v607
    %v609 = vmul.f32 %v606, %v608
    %v610 = vadd.f32 %v606, %v609
    %vm611 = vweird.f32 %v604
    %vm612 = vweird.f32 %v606
    %vm613 = vmor %vm611, %vm612
    %v614 = vsel %vm613, %v606, %v610
    %v615 = vand.u32 2147483647, %v604
    %vm616 = vcmp.eq.f32.partialorder %v615, 8.507059e+37
    %v617 = vand.u32 %v604, 2147483648
    %v618 = vor.u32 1.1754944e-38, %v617
    %v619 = vsel %vm616, %v618, %v614
    %v620 = vmul.f32 1.0, %v619
    %v621 = vrcp.pop %v605
    %v622 = vmul.f32 %v605, %v621
    %v623 = vsub.f32 1.0, %v622
    %v624 = vmul.f32 %v621, %v623
    %v625 = vadd.f32 %v621, %v624
    %vm626 = vweird.f32 %v605
    %vm627 = vweird.f32 %v621
    %vm628 = vmor %vm626, %vm627
    %v629 = vsel %vm628, %v621, %v625
    %v630 = vand.u32 2147483647, %v605
    %vm631 = vcmp.eq.f32.partialorder %v630, 8.507059e+37
    %v632 = vand.u32 %v605, 2147483648
    %v633 = vor.u32 1.1754944e-38, %v632
    %v634 = vsel %vm631, %v633, %v629
    %v635 = vmul.f32 1.0, %v634
    %v636 = vtanh.pop %v597
    %v637 = vmul.f32 %v620, %v460
    %639 = vrot.lane.b32.xlu0 %v636, 64
    %v640 = vpop.permute.xlu0 %639
    %v642 = vmul.f32 %v620, %v640
    %644 = vrot.lane.b32.xlu0 %v642, 64
    %v645 = vpop.permute.xlu0 %644
    %v647 = vadd.f32 %v637, %v645
    %v648 = vtanh.pop %v647
    %650 = vrot.lane.b32.xlu0 %v648, 64
    %v651 = vpop.permute.xlu0 %650
    %v653 = vmul.f32 %v635, %v651
    %v656 = vrot.slane %v554, 4
    %v657 = vrot.slane %v567, 4
    %v660 = vadd.f32 %v120, %v656
    %v661 = vadd.f32 %v134, %v657
    %v662 = vxor.u32 %v660, 2147483648
    %v663 = vxor.u32 %v661, 2147483648
    %v664 = vmul.f32 %v662, 1.442695
    %v665 = vpow.pop %v664
    %v666 = vmul.f32 %v663, 1.442695
    %v667 = vpow.pop %v666
    %v668 = vadd.f32 %v665, 1.0
    %v669 = vadd.f32 %v667, 1.0
    %v670 = vrcp.pop %v668
    %v671 = vmul.f32 %v668, %v670
    %v672 = vsub.f32 1.0, %v671
    %v673 = vmul.f32 %v670, %v672
    %v674 = vadd.f32 %v670, %v673
    %vm675 = vweird.f32 %v668
    %vm676 = vweird.f32 %v670
    %vm677 = vmor %vm675, %vm676
    %v678 = vsel %vm677, %v670, %v674
    %v679 = vand.u32 2147483647, %v668
    %vm680 = vcmp.eq.f32.partialorder %v679, 8.507059e+37
    %v681 = vand.u32 %v668, 2147483648
    %v682 = vor.u32 1.1754944e-38, %v681
    %v683 = vsel %vm680, %v682, %v678
    %v684 = vmul.f32 1.0, %v683
    %v685 = vrcp.pop %v669
    %v686 = vmul.f32 %v669, %v685
    %v687 = vsub.f32 1.0, %v686
    %v688 = vmul.f32 %v685, %v687
    %v689 = vadd.f32 %v685, %v688
    %vm690 = vweird.f32 %v669
    %vm691 = vweird.f32 %v685
    %vm692 = vmor %vm690, %vm691
    %v693 = vsel %vm692, %v685, %v689
    %v694 = vand.u32 2147483647, %v669
    %vm695 = vcmp.eq.f32.partialorder %v694, 8.507059e+37
    %v696 = vand.u32 %v669, 2147483648
    %v697 = vor.u32 1.1754944e-38, %v696
    %v698 = vsel %vm695, %v697, %v693
    %v699 = vmul.f32 1.0, %v698
    %v700 = vtanh.pop %v661
    %v702 = vrot.slane %v527, 6
    %v704 = vmul.f32 %v684, %v702
    %706 = vrot.lane.b32.xlu0 %v700, 64
    %v707 = vpop.permute.xlu0 %706
    %v709 = vmul.f32 %v684, %v707
    %711 = vrot.lane.b32.xlu0 %v709, 64
    %v712 = vpop.permute.xlu0 %711
    %v714 = vadd.f32 %v704, %v712
    %v715 = vtanh.pop %v714
    %717 = vrot.lane.b32.xlu0 %v715, 64
    %v718 = vpop.permute.xlu0 %717
    %v720 = vmul.f32 %v699, %v718
    %v722 = vrot.slane %v653, 4
    %723 = vrot.lane.b32.xlu0 %v722, 64
    %v724 = vpop.permute.xlu0 %723
    %v726 = vsel %vm194, %v720, %v724
    %v727 = vpack.c.bf16 %v726, %v726
    %v729 = vrot.slane %v727, 2
    %731 = vmatpush.bf16.msra.mxu0 %v321
    %732 = vmatpush.bf16.msra.mxu0 %v317
    %733 = vmatpush.bf16.msra.mxu0 %v313
    %734 = vmatpush.bf16.msra.mxu0 %v309
    %735 = vmatpush.bf16.msra.mxu0 %v305
    %736 = vmatpush.bf16.msra.mxu0 %v301
    %737 = vmatpush.bf16.msra.mxu0 %v297
    %738 = vmatpush.bf16.msra.mxu0 %v293
    %739 = vmatmul.bf16.gmra.mxu0 %v729
    %v740 = vpop.f32.mrf.mxu0
    %v741 = vadd.f32 0.0, %v740
    %v742 = vpop.f32.mrf.mxu0
    %743 = vdwg.mxu0
    %744 = vmatpush.bf16.msra.mxu0 %v322
    %745 = vmatpush.bf16.msra.mxu0 %v318
    %746 = vmatpush.bf16.msra.mxu0 %v314
    %747 = vmatpush.bf16.msra.mxu0 %v310
    %748 = vmatpush.bf16.msra.mxu0 %v306
    %749 = vmatpush.bf16.msra.mxu0 %v302
    %750 = vmatpush.bf16.msra.mxu0 %v298
    %751 = vmatpush.bf16.msra.mxu0 %v294
    %752 = vmatmul.bf16.gmra.mxu0 %v729
    %v753 = vpop.f32.mrf.mxu0
    %v754 = vadd.f32 0.0, %v753
    %v755 = vpop.f32.mrf.mxu0
    %756 = vdwg.mxu0
    %757 = vmatpush.bf16.msra.mxu0 %v323
    %758 = vmatpush.bf16.msra.mxu0 %v319
    %759 = vmatpush.bf16.msra.mxu0 %v315
    %760 = vmatpush.bf16.msra.mxu0 %v311
    %761 = vmatpush.bf16.msra.mxu0 %v307
    %762 = vmatpush.bf16.msra.mxu0 %v303
    %763 = vmatpush.bf16.msra.mxu0 %v299
    %764 = vmatpush.bf16.msra.mxu0 %v295
    %765 = vmatmul.bf16.gmra.mxu0 %v729
    %v766 = vpop.f32.mrf.mxu0
    %v767 = vadd.f32 0.0, %v766
    %v768 = vpop.f32.mrf.mxu0
    %769 = vdwg.mxu0
    %770 = vmatpush.bf16.msra.mxu0 %v324
    %771 = vmatpush.bf16.msra.mxu0 %v320
    %772 = vmatpush.bf16.msra.mxu0 %v316
    %773 = vmatpush.bf16.msra.mxu0 %v312
    %774 = vmatpush.bf16.msra.mxu0 %v308
    %775 = vmatpush.bf16.msra.mxu0 %v304
    %776 = vmatpush.bf16.msra.mxu0 %v300
    %777 = vmatpush.bf16.msra.mxu0 %v296
    %778 = vmatmul.bf16.gmra.mxu0 %v729
    %v779 = vpop.f32.mrf.mxu0
    %v780 = vadd.f32 0.0, %v779
    %v781 = vpop.f32.mrf.mxu0
    %782 = vdwg.mxu0
    %v783 = vadd.f32 %v767, %v77
    %v784 = vadd.f32 %v780, %v78
    %v785 = vxor.u32 %v783, 2147483648
    %v786 = vxor.u32 %v784, 2147483648
    %v787 = vmul.f32 %v785, 1.442695
    %v788 = vpow.pop %v787
    %v789 = vmul.f32 %v786, 1.442695
    %v790 = vpow.pop %v789
    %v791 = vadd.f32 %v788, 1.0
    %v792 = vadd.f32 %v790, 1.0
    %v793 = vrcp.pop %v791
    %v794 = vmul.f32 %v791, %v793
    %v795 = vsub.f32 1.0, %v794
    %v796 = vmul.f32 %v793, %v795
    %v797 = vadd.f32 %v793, %v796
    %vm798 = vweird.f32 %v791
    %vm799 = vweird.f32 %v793
    %vm800 = vmor %vm798, %vm799
    %v801 = vsel %vm800, %v793, %v797
    %v802 = vand.u32 2147483647, %v791
    %vm803 = vcmp.eq.f32.partialorder %v802, 8.507059e+37
    %v804 = vand.u32 %v791, 2147483648
    %v805 = vor.u32 1.1754944e-38, %v804
    %v806 = vsel %vm803, %v805, %v801
    %v807 = vmul.f32 1.0, %v806
    %v808 = vrcp.pop %v792
    %v809 = vmul.f32 %v792, %v808
    %v810 = vsub.f32 1.0, %v809
    %v811 = vmul.f32 %v808, %v810
    %v812 = vadd.f32 %v808, %v811
    %vm813 = vweird.f32 %v792
    %vm814 = vweird.f32 %v808
    %vm815 = vmor %vm813, %vm814
    %v816 = vsel %vm815, %v808, %v812
    %v817 = vand.u32 2147483647, %v792
    %vm818 = vcmp.eq.f32.partialorder %v817, 8.507059e+37
    %v819 = vand.u32 %v792, 2147483648
    %v820 = vor.u32 1.1754944e-38, %v819
    %v821 = vsel %vm818, %v820, %v816
    %v822 = vmul.f32 1.0, %v821
    %v823 = vtanh.pop %v784
    %v824 = vmul.f32 %v807, %v647
    %826 = vrot.lane.b32.xlu0 %v823, 64
    %v827 = vpop.permute.xlu0 %826
    %v829 = vmul.f32 %v807, %v827
    %831 = vrot.lane.b32.xlu0 %v829, 64
    %v832 = vpop.permute.xlu0 %831
    %v834 = vadd.f32 %v824, %v832
    %v835 = vtanh.pop %v834
    %837 = vrot.lane.b32.xlu0 %v835, 64
    %v838 = vpop.permute.xlu0 %837
    %v840 = vmul.f32 %v822, %v838
    %v843 = vrot.slane %v741, 2
    %v844 = vrot.slane %v754, 2
    %v847 = vadd.f32 %v120, %v843
    %v848 = vadd.f32 %v134, %v844
    %v849 = vxor.u32 %v847, 2147483648
    %v850 = vxor.u32 %v848, 2147483648
    %v851 = vmul.f32 %v849, 1.442695
    %v852 = vpow.pop %v851
    %v853 = vmul.f32 %v850, 1.442695
    %v854 = vpow.pop %v853
    %v855 = vadd.f32 %v852, 1.0
    %v856 = vadd.f32 %v854, 1.0
    %v857 = vrcp.pop %v855
    %v858 = vmul.f32 %v855, %v857
    %v859 = vsub.f32 1.0, %v858
    %v860 = vmul.f32 %v857, %v859
    %v861 = vadd.f32 %v857, %v860
    %vm862 = vweird.f32 %v855
    %vm863 = vweird.f32 %v857
    %vm864 = vmor %vm862, %vm863
    %v865 = vsel %vm864, %v857, %v861
    %v866 = vand.u32 2147483647, %v855
    %vm867 = vcmp.eq.f32.partialorder %v866, 8.507059e+37
    %v868 = vand.u32 %v855, 2147483648
    %v869 = vor.u32 1.1754944e-38, %v868
    %v870 = vsel %vm867, %v869, %v865
    %v871 = vmul.f32 1.0, %v870
    %v872 = vrcp.pop %v856
    %v873 = vmul.f32 %v856, %v872
    %v874 = vsub.f32 1.0, %v873
    %v875 = vmul.f32 %v872, %v874
    %v876 = vadd.f32 %v872, %v875
    %vm877 = vweird.f32 %v856
    %vm878 = vweird.f32 %v872
    %vm879 = vmor %vm877, %vm878
    %v880 = vsel %vm879, %v872, %v876
    %v881 = vand.u32 2147483647, %v856
    %vm882 = vcmp.eq.f32.partialorder %v881, 8.507059e+37
    %v883 = vand.u32 %v856, 2147483648
    %v884 = vor.u32 1.1754944e-38, %v883
    %v885 = vsel %vm882, %v884, %v880
    %v886 = vmul.f32 1.0, %v885
    %v887 = vtanh.pop %v848
    %v889 = vrot.slane %v714, 6
    %v891 = vmul.f32 %v871, %v889
    %893 = vrot.lane.b32.xlu0 %v887, 64
    %v894 = vpop.permute.xlu0 %893
    %v896 = vmul.f32 %v871, %v894
    %898 = vrot.lane.b32.xlu0 %v896, 64
    %v899 = vpop.permute.xlu0 %898
    %v901 = vadd.f32 %v891, %v899
    %v902 = vtanh.pop %v901
    %904 = vrot.lane.b32.xlu0 %v902, 64
    %v905 = vpop.permute.xlu0 %904
    %v907 = vmul.f32 %v886, %v905
    %v909 = vrot.slane %v840, 2
    %910 = vrot.lane.b32.xlu0 %v909, 64
    %v911 = vpop.permute.xlu0 %910
    %v913 = vsel %vm194, %v907, %v911
    %v914 = vpack.c.bf16 %v913, %v913
    %v916 = vrot.slane %v914, 3
    %918 = vmatpush.bf16.msra.mxu0 %v321
    %919 = vmatpush.bf16.msra.mxu0 %v317
    %920 = vmatpush.bf16.msra.mxu0 %v313
    %921 = vmatpush.bf16.msra.mxu0 %v309
    %922 = vmatpush.bf16.msra.mxu0 %v305
    %923 = vmatpush.bf16.msra.mxu0 %v301
    %924 = vmatpush.bf16.msra.mxu0 %v297
    %925 = vmatpush.bf16.msra.mxu0 %v293
    %926 = vmatmul.bf16.gmra.mxu0 %v916
    %v927 = vpop.f32.mrf.mxu0
    %v928 = vadd.f32 0.0, %v927
    %v929 = vpop.f32.mrf.mxu0
    %930 = vdwg.mxu0
    %931 = vmatpush.bf16.msra.mxu0 %v322
    %932 = vmatpush.bf16.msra.mxu0 %v318
    %933 = vmatpush.bf16.msra.mxu0 %v314
    %934 = vmatpush.bf16.msra.mxu0 %v310
    %935 = vmatpush.bf16.msra.mxu0 %v306
    %936 = vmatpush.bf16.msra.mxu0 %v302
    %937 = vmatpush.bf16.msra.mxu0 %v298
    %938 = vmatpush.bf16.msra.mxu0 %v294
    %939 = vmatmul.bf16.gmra.mxu0 %v916
    %v940 = vpop.f32.mrf.mxu0
    %v941 = vadd.f32 0.0, %v940
    %v942 = vpop.f32.mrf.mxu0
    %943 = vdwg.mxu0
    %944 = vmatpush.bf16.msra.mxu0 %v323
    %945 = vmatpush.bf16.msra.mxu0 %v319
    %946 = vmatpush.bf16.msra.mxu0 %v315
    %947 = vmatpush.bf16.msra.mxu0 %v311
    %948 = vmatpush.bf16.msra.mxu0 %v307
    %949 = vmatpush.bf16.msra.mxu0 %v303
    %950 = vmatpush.bf16.msra.mxu0 %v299
    %951 = vmatpush.bf16.msra.mxu0 %v295
    %952 = vmatmul.bf16.gmra.mxu0 %v916
    %v953 = vpop.f32.mrf.mxu0
    %v954 = vadd.f32 0.0, %v953
    %v955 = vpop.f32.mrf.mxu0
    %956 = vdwg.mxu0
    %957 = vmatpush.bf16.msra.mxu0 %v324
    %958 = vmatpush.bf16.msra.mxu0 %v320
    %959 = vmatpush.bf16.msra.mxu0 %v316
    %960 = vmatpush.bf16.msra.mxu0 %v312
    %961 = vmatpush.bf16.msra.mxu0 %v308
    %962 = vmatpush.bf16.msra.mxu0 %v304
    %963 = vmatpush.bf16.msra.mxu0 %v300
    %964 = vmatpush.bf16.msra.mxu0 %v296
    %965 = vmatmul.bf16.gmra.mxu0 %v916
    %v966 = vpop.f32.mrf.mxu0
    %v967 = vadd.f32 0.0, %v966
    %v968 = vpop.f32.mrf.mxu0
    %969 = vdwg.mxu0
    %v970 = vadd.f32 %v954, %v77
    %v971 = vadd.f32 %v967, %v78
    %v972 = vxor.u32 %v970, 2147483648
    %v973 = vxor.u32 %v971, 2147483648
    %v974 = vmul.f32 %v972, 1.442695
    %v975 = vpow.pop %v974
    %v976 = vmul.f32 %v973, 1.442695
    %v977 = vpow.pop %v976
    %v978 = vadd.f32 %v975, 1.0
    %v979 = vadd.f32 %v977, 1.0
    %v980 = vrcp.pop %v978
    %v981 = vmul.f32 %v978, %v980
    %v982 = vsub.f32 1.0, %v981
    %v983 = vmul.f32 %v980, %v982
    %v984 = vadd.f32 %v980, %v983
    %vm985 = vweird.f32 %v978
    %vm986 = vweird.f32 %v980
    %vm987 = vmor %vm985, %vm986
    %v988 = vsel %vm987, %v980, %v984
    %v989 = vand.u32 2147483647, %v978
    %vm990 = vcmp.eq.f32.partialorder %v989, 8.507059e+37
    %v991 = vand.u32 %v978, 2147483648
    %v992 = vor.u32 1.1754944e-38, %v991
    %v993 = vsel %vm990, %v992, %v988
    %v994 = vmul.f32 1.0, %v993
    %v995 = vrcp.pop %v979
    %v996 = vmul.f32 %v979, %v995
    %v997 = vsub.f32 1.0, %v996
    %v998 = vmul.f32 %v995, %v997
    %v999 = vadd.f32 %v995, %v998
    %vm1000 = vweird.f32 %v979
    %vm1001 = vweird.f32 %v995
    %vm1002 = vmor %vm1000, %vm1001
    %v1003 = vsel %vm1002, %v995, %v999
    %v1004 = vand.u32 2147483647, %v979
    %vm1005 = vcmp.eq.f32.partialorder %v1004, 8.507059e+37
    %v1006 = vand.u32 %v979, 2147483648
    %v1007 = vor.u32 1.1754944e-38, %v1006
    %v1008 = vsel %vm1005, %v1007, %v1003
    %v1009 = vmul.f32 1.0, %v1008
    %v1010 = vtanh.pop %v971
    %v1011 = vmul.f32 %v994, %v834
    %1013 = vrot.lane.b32.xlu0 %v1010, 64
    %v1014 = vpop.permute.xlu0 %1013
    %v1016 = vmul.f32 %v994, %v1014
    %1018 = vrot.lane.b32.xlu0 %v1016, 64
    %v1019 = vpop.permute.xlu0 %1018
    %v1021 = vadd.f32 %v1011, %v1019
    %v1022 = vtanh.pop %v1021
    %1024 = vrot.lane.b32.xlu0 %v1022, 64
    %v1025 = vpop.permute.xlu0 %1024
    %v1027 = vmul.f32 %v1009, %v1025
    %v1028 = vadd.f32 %v122, %v928
    %v1029 = vadd.f32 %v136, %v941
    %v1030 = vxor.u32 %v1028, 2147483648
    %v1031 = vxor.u32 %v1029, 2147483648
    %v1032 = vmul.f32 %v1030, 1.442695
    %v1033 = vpow.pop %v1032
    %v1034 = vmul.f32 %v1031, 1.442695
    %v1035 = vpow.pop %v1034
    %v1036 = vadd.f32 %v1033, 1.0
    %v1037 = vadd.f32 %v1035, 1.0
    %v1038 = vrcp.pop %v1036
    %v1039 = vmul.f32 %v1036, %v1038
    %v1040 = vsub.f32 1.0, %v1039
    %v1041 = vmul.f32 %v1038, %v1040
    %v1042 = vadd.f32 %v1038, %v1041
    %vm1043 = vweird.f32 %v1036
    %vm1044 = vweird.f32 %v1038
    %vm1045 = vmor %vm1043, %vm1044
    %v1046 = vsel %vm1045, %v1038, %v1042
    %v1047 = vand.u32 2147483647, %v1036
    %vm1048 = vcmp.eq.f32.partialorder %v1047, 8.507059e+37
    %v1049 = vand.u32 %v1036, 2147483648
    %v1050 = vor.u32 1.1754944e-38, %v1049
    %v1051 = vsel %vm1048, %v1050, %v1046
    %v1052 = vmul.f32 1.0, %v1051
    %v1053 = vrcp.pop %v1037
    %v1054 = vmul.f32 %v1037, %v1053
    %v1055 = vsub.f32 1.0, %v1054
    %v1056 = vmul.f32 %v1053, %v1055
    %v1057 = vadd.f32 %v1053, %v1056
    %vm1058 = vweird.f32 %v1037
    %vm1059 = vweird.f32 %v1053
    %vm1060 = vmor %vm1058, %vm1059
    %v1061 = vsel %vm1060, %v1053, %v1057
    %v1062 = vand.u32 2147483647, %v1037
    %vm1063 = vcmp.eq.f32.partialorder %v1062, 8.507059e+37
    %v1064 = vand.u32 %v1037, 2147483648
    %v1065 = vor.u32 1.1754944e-38, %v1064
    %v1066 = vsel %vm1063, %v1065, %v1061
    %v1067 = vmul.f32 1.0, %v1066
    %v1068 = vtanh.pop %v1029
    %v1070 = vrot.slane %v901, 6
    %v1072 = vmul.f32 %v1052, %v1070
    %1074 = vrot.lane.b32.xlu0 %v1068, 64
    %v1075 = vpop.permute.xlu0 %1074
    %v1077 = vmul.f32 %v1052, %v1075
    %1079 = vrot.lane.b32.xlu0 %v1077, 64
    %v1080 = vpop.permute.xlu0 %1079
    %v1082 = vadd.f32 %v1072, %v1080
    %v1083 = vtanh.pop %v1082
    %1085 = vrot.lane.b32.xlu0 %v1083, 64
    %v1086 = vpop.permute.xlu0 %1085
    %v1088 = vmul.f32 %v1067, %v1086
    %1090 = vrot.lane.b32.xlu0 %v1027, 64
    %v1091 = vpop.permute.xlu0 %1090
    %v1093 = vsel %vm194, %v1088, %v1091
    %v1094 = vpack.c.bf16 %v1093, %v1093
    %1095 = vmatpush.bf16.msra.mxu0 %v321
    %1096 = vmatpush.bf16.msra.mxu0 %v317
    %1097 = vmatpush.bf16.msra.mxu0 %v313
    %1098 = vmatpush.bf16.msra.mxu0 %v309
    %1099 = vmatpush.bf16.msra.mxu0 %v305
    %1100 = vmatpush.bf16.msra.mxu0 %v301
    %1101 = vmatpush.bf16.msra.mxu0 %v297
    %1102 = vmatpush.bf16.msra.mxu0 %v293
    %1103 = vmatmul.bf16.gmra.mxu0 %v1094
    %v1104 = vpop.f32.mrf.mxu0
    %v1105 = vadd.f32 0.0, %v1104
    %v1106 = vpop.f32.mrf.mxu0
    %1107 = vdwg.mxu0
    %1108 = vmatpush.bf16.msra.mxu0 %v322
    %1109 = vmatpush.bf16.msra.mxu0 %v318
    %1110 = vmatpush.bf16.msra.mxu0 %v314
    %1111 = vmatpush.bf16.msra.mxu0 %v310
    %1112 = vmatpush.bf16.msra.mxu0 %v306
    %1113 = vmatpush.bf16.msra.mxu0 %v302
    %1114 = vmatpush.bf16.msra.mxu0 %v298
    %1115 = vmatpush.bf16.msra.mxu0 %v294
    %1116 = vmatmul.bf16.gmra.mxu0 %v1094
    %v1117 = vpop.f32.mrf.mxu0
    %v1118 = vadd.f32 0.0, %v1117
    %v1119 = vpop.f32.mrf.mxu0
    %1120 = vdwg.mxu0
    %1121 = vmatpush.bf16.msra.mxu0 %v323
    %1122 = vmatpush.bf16.msra.mxu0 %v319
    %1123 = vmatpush.bf16.msra.mxu0 %v315
    %1124 = vmatpush.bf16.msra.mxu0 %v311
    %1125 = vmatpush.bf16.msra.mxu0 %v307
    %1126 = vmatpush.bf16.msra.mxu0 %v303
    %1127 = vmatpush.bf16.msra.mxu0 %v299
    %1128 = vmatpush.bf16.msra.mxu0 %v295
    %1129 = vmatmul.bf16.gmra.mxu0 %v1094
    %v1130 = vpop.f32.mrf.mxu0
    %v1131 = vadd.f32 0.0, %v1130
    %v1132 = vpop.f32.mrf.mxu0
    %1133 = vdwg.mxu0
    %1134 = vmatpush.bf16.msra.mxu0 %v324
    %1135 = vmatpush.bf16.msra.mxu0 %v320
    %1136 = vmatpush.bf16.msra.mxu0 %v316
    %1137 = vmatpush.bf16.msra.mxu0 %v312
    %1138 = vmatpush.bf16.msra.mxu0 %v308
    %1139 = vmatpush.bf16.msra.mxu0 %v304
    %1140 = vmatpush.bf16.msra.mxu0 %v300
    %1141 = vmatpush.bf16.msra.mxu0 %v296
    %1142 = vmatmul.bf16.gmra.mxu0 %v1094
    %v1143 = vpop.f32.mrf.mxu0
    %v1144 = vadd.f32 0.0, %v1143
    %v1145 = vpop.f32.mrf.mxu0
    %1146 = vdwg.mxu0
    %v1147 = vadd.f32 %v1131, %v77
    %v1148 = vadd.f32 %v1144, %v78
    %v1149 = vxor.u32 %v1147, 2147483648
    %v1150 = vxor.u32 %v1148, 2147483648
    %v1151 = vmul.f32 %v1149, 1.442695
    %v1152 = vpow.pop %v1151
    %v1153 = vmul.f32 %v1150, 1.442695
    %v1154 = vpow.pop %v1153
    %v1155 = vadd.f32 %v1152, 1.0
    %v1156 = vadd.f32 %v1154, 1.0
    %v1157 = vrcp.pop %v1155
    %v1158 = vmul.f32 %v1155, %v1157
    %v1159 = vsub.f32 1.0, %v1158
    %v1160 = vmul.f32 %v1157, %v1159
    %v1161 = vadd.f32 %v1157, %v1160
    %vm1162 = vweird.f32 %v1155
    %vm1163 = vweird.f32 %v1157
    %vm1164 = vmor %vm1162, %vm1163
    %v1165 = vsel %vm1164, %v1157, %v1161
    %v1166 = vand.u32 2147483647, %v1155
    %vm1167 = vcmp.eq.f32.partialorder %v1166, 8.507059e+37
    %v1168 = vand.u32 %v1155, 2147483648
    %v1169 = vor.u32 1.1754944e-38, %v1168
    %v1170 = vsel %vm1167, %v1169, %v1165
    %v1171 = vmul.f32 1.0, %v1170
    %v1172 = vrcp.pop %v1156
    %v1173 = vmul.f32 %v1156, %v1172
    %v1174 = vsub.f32 1.0, %v1173
    %v1175 = vmul.f32 %v1172, %v1174
    %v1176 = vadd.f32 %v1172, %v1175
    %vm1177 = vweird.f32 %v1156
    %vm1178 = vweird.f32 %v1172
    %vm1179 = vmor %vm1177, %vm1178
    %v1180 = vsel %vm1179, %v1172, %v1176
    %v1181 = vand.u32 2147483647, %v1156
    %vm1182 = vcmp.eq.f32.partialorder %v1181, 8.507059e+37
    %v1183 = vand.u32 %v1156, 2147483648
    %v1184 = vor.u32 1.1754944e-38, %v1183
    %v1185 = vsel %vm1182, %v1184, %v1180
    %v1186 = vmul.f32 1.0, %v1185
    %v1187 = vtanh.pop %v1148
    %v1188 = vmul.f32 %v1171, %v1021
    %1190 = vrot.lane.b32.xlu0 %v1187, 64
    %v1191 = vpop.permute.xlu0 %1190
    %v1193 = vmul.f32 %v1171, %v1191
    %1195 = vrot.lane.b32.xlu0 %v1193, 64
    %v1196 = vpop.permute.xlu0 %1195
    %v1198 = vadd.f32 %v1188, %v1196
    %v1199 = vtanh.pop %v1198
    %1201 = vrot.lane.b32.xlu0 %v1199, 64
    %v1202 = vpop.permute.xlu0 %1201
    %v1204 = vmul.f32 %v1186, %v1202
    %v1207 = vrot.slane %v1105, 6
    %v1208 = vrot.slane %v1118, 6
    %v1211 = vadd.f32 %v122, %v1207
    %v1212 = vadd.f32 %v136, %v1208
    %v1213 = vxor.u32 %v1211, 2147483648
    %v1214 = vxor.u32 %v1212, 2147483648
    %v1215 = vmul.f32 %v1213, 1.442695
    %v1216 = vpow.pop %v1215
    %v1217 = vmul.f32 %v1214, 1.442695
    %v1218 = vpow.pop %v1217
    %v1219 = vadd.f32 %v1216, 1.0
    %v1220 = vadd.f32 %v1218, 1.0
    %v1221 = vrcp.pop %v1219
    %v1222 = vmul.f32 %v1219, %v1221
    %v1223 = vsub.f32 1.0, %v1222
    %v1224 = vmul.f32 %v1221, %v1223
    %v1225 = vadd.f32 %v1221, %v1224
    %vm1226 = vweird.f32 %v1219
    %vm1227 = vweird.f32 %v1221
    %vm1228 = vmor %vm1226, %vm1227
    %v1229 = vsel %vm1228, %v1221, %v1225
    %v1230 = vand.u32 2147483647, %v1219
    %vm1231 = vcmp.eq.f32.partialorder %v1230, 8.507059e+37
    %v1232 = vand.u32 %v1219, 2147483648
    %v1233 = vor.u32 1.1754944e-38, %v1232
    %v1234 = vsel %vm1231, %v1233, %v1229
    %v1235 = vmul.f32 1.0, %v1234
    %v1236 = vrcp.pop %v1220
    %v1237 = vmul.f32 %v1220, %v1236
    %v1238 = vsub.f32 1.0, %v1237
    %v1239 = vmul.f32 %v1236, %v1238
    %v1240 = vadd.f32 %v1236, %v1239
    %vm1241 = vweird.f32 %v1220
    %vm1242 = vweird.f32 %v1236
    %vm1243 = vmor %vm1241, %vm1242
    %v1244 = vsel %vm1243, %v1236, %v1240
    %v1245 = vand.u32 2147483647, %v1220
    %vm1246 = vcmp.eq.f32.partialorder %v1245, 8.507059e+37
    %v1247 = vand.u32 %v1220, 2147483648
    %v1248 = vor.u32 1.1754944e-38, %v1247
    %v1249 = vsel %vm1246, %v1248, %v1244
    %v1250 = vmul.f32 1.0, %v1249
    %v1251 = vtanh.pop %v1212
    %v1253 = vrot.slane %v1082, 6
    %v1255 = vmul.f32 %v1235, %v1253
    %1257 = vrot.lane.b32.xlu0 %v1251, 64
    %v1258 = vpop.permute.xlu0 %1257
    %v1260 = vmul.f32 %v1235, %v1258
    %1262 = vrot.lane.b32.xlu0 %v1260, 64
    %v1263 = vpop.permute.xlu0 %1262
    %v1265 = vadd.f32 %v1255, %v1263
    %v1266 = vtanh.pop %v1265
    %1268 = vrot.lane.b32.xlu0 %v1266, 64
    %v1269 = vpop.permute.xlu0 %1268
    %v1271 = vmul.f32 %v1250, %v1269
    %v1273 = vrot.slane %v1204, 6
    %1274 = vrot.lane.b32.xlu0 %v1273, 64
    %v1275 = vpop.permute.xlu0 %1274
    %v1277 = vsel %vm194, %v1271, %v1275
    %v1278 = vpack.c.bf16 %v1277, %v1277
    %v1280 = vrot.slane %v1278, 1
    %1282 = vmatpush.bf16.msra.mxu0 %v321
    %1283 = vmatpush.bf16.msra.mxu0 %v317
    %1284 = vmatpush.bf16.msra.mxu0 %v313
    %1285 = vmatpush.bf16.msra.mxu0 %v309
    %1286 = vmatpush.bf16.msra.mxu0 %v305
    %1287 = vmatpush.bf16.msra.mxu0 %v301
    %1288 = vmatpush.bf16.msra.mxu0 %v297
    %1289 = vmatpush.bf16.msra.mxu0 %v293
    %1290 = vmatmul.bf16.gmra.mxu0 %v1280
    %v1291 = vpop.f32.mrf.mxu0
    %v1292 = vadd.f32 0.0, %v1291
    %v1293 = vpop.f32.mrf.mxu0
    %1294 = vdwg.mxu0
    %1295 = vmatpush.bf16.msra.mxu0 %v322
    %1296 = vmatpush.bf16.msra.mxu0 %v318
    %1297 = vmatpush.bf16.msra.mxu0 %v314
    %1298 = vmatpush.bf16.msra.mxu0 %v310
    %1299 = vmatpush.bf16.msra.mxu0 %v306
    %1300 = vmatpush.bf16.msra.mxu0 %v302
    %1301 = vmatpush.bf16.msra.mxu0 %v298
    %1302 = vmatpush.bf16.msra.mxu0 %v294
    %1303 = vmatmul.bf16.gmra.mxu0 %v1280
    %v1304 = vpop.f32.mrf.mxu0
    %v1305 = vadd.f32 0.0, %v1304
    %v1306 = vpop.f32.mrf.mxu0
    %1307 = vdwg.mxu0
    %1308 = vmatpush.bf16.msra.mxu0 %v323
    %1309 = vmatpush.bf16.msra.mxu0 %v319
    %1310 = vmatpush.bf16.msra.mxu0 %v315
    %1311 = vmatpush.bf16.msra.mxu0 %v311
    %1312 = vmatpush.bf16.msra.mxu0 %v307
    %1313 = vmatpush.bf16.msra.mxu0 %v303
    %1314 = vmatpush.bf16.msra.mxu0 %v299
    %1315 = vmatpush.bf16.msra.mxu0 %v295
    %1316 = vmatmul.bf16.gmra.mxu0 %v1280
    %v1317 = vpop.f32.mrf.mxu0
    %v1318 = vadd.f32 0.0, %v1317
    %v1319 = vpop.f32.mrf.mxu0
    %1320 = vdwg.mxu0
    %1321 = vmatpush.bf16.msra.mxu0 %v324
    %1322 = vmatpush.bf16.msra.mxu0 %v320
    %1323 = vmatpush.bf16.msra.mxu0 %v316
    %1324 = vmatpush.bf16.msra.mxu0 %v312
    %1325 = vmatpush.bf16.msra.mxu0 %v308
    %1326 = vmatpush.bf16.msra.mxu0 %v304
    %1327 = vmatpush.bf16.msra.mxu0 %v300
    %1328 = vmatpush.bf16.msra.mxu0 %v296
    %1329 = vmatmul.bf16.gmra.mxu0 %v1280
    %v1330 = vpop.f32.mrf.mxu0
    %v1331 = vadd.f32 0.0, %v1330
    %v1332 = vpop.f32.mrf.mxu0
    %1333 = vdwg.mxu0
    %v1334 = vadd.f32 %v1318, %v77
    %v1335 = vadd.f32 %v1331, %v78
    %v1336 = vxor.u32 %v1334, 2147483648
    %v1337 = vxor.u32 %v1335, 2147483648
    %v1338 = vmul.f32 %v1336, 1.442695
    %v1339 = vpow.pop %v1338
    %v1340 = vmul.f32 %v1337, 1.442695
    %v1341 = vpow.pop %v1340
    %v1342 = vadd.f32 %v1339, 1.0
    %v1343 = vadd.f32 %v1341, 1.0
    %v1344 = vrcp.pop %v1342
    %v1345 = vmul.f32 %v1342, %v1344
    %v1346 = vsub.f32 1.0, %v1345
    %v1347 = vmul.f32 %v1344, %v1346
    %v1348 = vadd.f32 %v1344, %v1347
    %vm1349 = vweird.f32 %v1342
    %vm1350 = vweird.f32 %v1344
    %vm1351 = vmor %vm1349, %vm1350
    %v1352 = vsel %vm1351, %v1344, %v1348
    %v1353 = vand.u32 2147483647, %v1342
    %vm1354 = vcmp.eq.f32.partialorder %v1353, 8.507059e+37
    %v1355 = vand.u32 %v1342, 2147483648
    %v1356 = vor.u32 1.1754944e-38, %v1355
    %v1357 = vsel %vm1354, %v1356, %v1352
    %v1358 = vmul.f32 1.0, %v1357
    %v1359 = vrcp.pop %v1343
    %v1360 = vmul.f32 %v1343, %v1359
    %v1361 = vsub.f32 1.0, %v1360
    %v1362 = vmul.f32 %v1359, %v1361
    %v1363 = vadd.f32 %v1359, %v1362
    %vm1364 = vweird.f32 %v1343
    %vm1365 = vweird.f32 %v1359
    %vm1366 = vmor %vm1364, %vm1365
    %v1367 = vsel %vm1366, %v1359, %v1363
    %v1368 = vand.u32 2147483647, %v1343
    %vm1369 = vcmp.eq.f32.partialorder %v1368, 8.507059e+37
    %v1370 = vand.u32 %v1343, 2147483648
    %v1371 = vor.u32 1.1754944e-38, %v1370
    %v1372 = vsel %vm1369, %v1371, %v1367
    %v1373 = vmul.f32 1.0, %v1372
    %v1374 = vtanh.pop %v1335
    %v1375 = vmul.f32 %v1358, %v1198
    %1377 = vrot.lane.b32.xlu0 %v1374, 64
    %v1378 = vpop.permute.xlu0 %1377
    %v1380 = vmul.f32 %v1358, %v1378
    %1382 = vrot.lane.b32.xlu0 %v1380, 64
    %v1383 = vpop.permute.xlu0 %1382
    %v1385 = vadd.f32 %v1375, %v1383
    %v1386 = vtanh.pop %v1385
    %1388 = vrot.lane.b32.xlu0 %v1386, 64
    %v1389 = vpop.permute.xlu0 %1388
    %v1391 = vmul.f32 %v1373, %v1389
    %v1394 = vrot.slane %v1292, 4
    %v1395 = vrot.slane %v1305, 4
    %v1398 = vadd.f32 %v122, %v1394
    %v1399 = vadd.f32 %v136, %v1395
    %v1400 = vxor.u32 %v1398, 2147483648
    %v1401 = vxor.u32 %v1399, 2147483648
    %v1402 = vmul.f32 %v1400, 1.442695
    %v1403 = vpow.pop %v1402
    %v1404 = vmul.f32 %v1401, 1.442695
    %v1405 = vpow.pop %v1404
    %v1406 = vadd.f32 %v1403, 1.0
    %v1407 = vadd.f32 %v1405, 1.0
    %v1408 = vrcp.pop %v1406
    %v1409 = vmul.f32 %v1406, %v1408
    %v1410 = vsub.f32 1.0, %v1409
    %v1411 = vmul.f32 %v1408, %v1410
    %v1412 = vadd.f32 %v1408, %v1411
    %vm1413 = vweird.f32 %v1406
    %vm1414 = vweird.f32 %v1408
    %vm1415 = vmor %vm1413, %vm1414
    %v1416 = vsel %vm1415, %v1408, %v1412
    %v1417 = vand.u32 2147483647, %v1406
    %vm1418 = vcmp.eq.f32.partialorder %v1417, 8.507059e+37
    %v1419 = vand.u32 %v1406, 2147483648
    %v1420 = vor.u32 1.1754944e-38, %v1419
    %v1421 = vsel %vm1418, %v1420, %v1416
    %v1422 = vmul.f32 1.0, %v1421
    %v1423 = vrcp.pop %v1407
    %v1424 = vmul.f32 %v1407, %v1423
    %v1425 = vsub.f32 1.0, %v1424
    %v1426 = vmul.f32 %v1423, %v1425
    %v1427 = vadd.f32 %v1423, %v1426
    %vm1428 = vweird.f32 %v1407
    %vm1429 = vweird.f32 %v1423
    %vm1430 = vmor %vm1428, %vm1429
    %v1431 = vsel %vm1430, %v1423, %v1427
    %v1432 = vand.u32 2147483647, %v1407
    %vm1433 = vcmp.eq.f32.partialorder %v1432, 8.507059e+37
    %v1434 = vand.u32 %v1407, 2147483648
    %v1435 = vor.u32 1.1754944e-38, %v1434
    %v1436 = vsel %vm1433, %v1435, %v1431
    %v1437 = vmul.f32 1.0, %v1436
    %v1438 = vtanh.pop %v1399
    %v1440 = vrot.slane %v1265, 6
    %v1442 = vmul.f32 %v1422, %v1440
    %1444 = vrot.lane.b32.xlu0 %v1438, 64
    %v1445 = vpop.permute.xlu0 %1444
    %v1447 = vmul.f32 %v1422, %v1445
    %1449 = vrot.lane.b32.xlu0 %v1447, 64
    %v1450 = vpop.permute.xlu0 %1449
    %v1452 = vadd.f32 %v1442, %v1450
    %v1453 = vtanh.pop %v1452
    %1455 = vrot.lane.b32.xlu0 %v1453, 64
    %v1456 = vpop.permute.xlu0 %1455
    %v1458 = vmul.f32 %v1437, %v1456
    %v1460 = vrot.slane %v1391, 4
    %1461 = vrot.lane.b32.xlu0 %v1460, 64
    %v1462 = vpop.permute.xlu0 %1461
    %v1464 = vsel %vm194, %v1458, %v1462
    %v1465 = vpack.c.bf16 %v1464, %v1464
    %v1467 = vrot.slane %v1465, 2
    %1469 = vmatpush.bf16.msra.mxu0 %v321
    %1470 = vmatpush.bf16.msra.mxu0 %v317
    %1471 = vmatpush.bf16.msra.mxu0 %v313
    %1472 = vmatpush.bf16.msra.mxu0 %v309
    %1473 = vmatpush.bf16.msra.mxu0 %v305
    %1474 = vmatpush.bf16.msra.mxu0 %v301
    %1475 = vmatpush.bf16.msra.mxu0 %v297
    %1476 = vmatpush.bf16.msra.mxu0 %v293
    %1477 = vmatmul.bf16.gmra.mxu0 %v1467
    %v1478 = vpop.f32.mrf.mxu0
    %v1479 = vadd.f32 0.0, %v1478
    %v1480 = vpop.f32.mrf.mxu0
    %1481 = vdwg.mxu0
    %1482 = vmatpush.bf16.msra.mxu0 %v322
    %1483 = vmatpush.bf16.msra.mxu0 %v318
    %1484 = vmatpush.bf16.msra.mxu0 %v314
    %1485 = vmatpush.bf16.msra.mxu0 %v310
    %1486 = vmatpush.bf16.msra.mxu0 %v306
    %1487 = vmatpush.bf16.msra.mxu0 %v302
    %1488 = vmatpush.bf16.msra.mxu0 %v298
    %1489 = vmatpush.bf16.msra.mxu0 %v294
    %1490 = vmatmul.bf16.gmra.mxu0 %v1467
    %v1491 = vpop.f32.mrf.mxu0
    %v1492 = vadd.f32 0.0, %v1491
    %v1493 = vpop.f32.mrf.mxu0
    %1494 = vdwg.mxu0
    %1495 = vmatpush.bf16.msra.mxu0 %v323
    %1496 = vmatpush.bf16.msra.mxu0 %v319
    %1497 = vmatpush.bf16.msra.mxu0 %v315
    %1498 = vmatpush.bf16.msra.mxu0 %v311
    %1499 = vmatpush.bf16.msra.mxu0 %v307
    %1500 = vmatpush.bf16.msra.mxu0 %v303
    %1501 = vmatpush.bf16.msra.mxu0 %v299
    %1502 = vmatpush.bf16.msra.mxu0 %v295
    %1503 = vmatmul.bf16.gmra.mxu0 %v1467
    %v1504 = vpop.f32.mrf.mxu0
    %v1505 = vadd.f32 0.0, %v1504
    %v1506 = vpop.f32.mrf.mxu0
    %1507 = vdwg.mxu0
    %1508 = vmatpush.bf16.msra.mxu0 %v324
    %1509 = vmatpush.bf16.msra.mxu0 %v320
    %1510 = vmatpush.bf16.msra.mxu0 %v316
    %1511 = vmatpush.bf16.msra.mxu0 %v312
    %1512 = vmatpush.bf16.msra.mxu0 %v308
    %1513 = vmatpush.bf16.msra.mxu0 %v304
    %1514 = vmatpush.bf16.msra.mxu0 %v300
    %1515 = vmatpush.bf16.msra.mxu0 %v296
    %1516 = vmatmul.bf16.gmra.mxu0 %v1467
    %v1517 = vpop.f32.mrf.mxu0
    %v1518 = vadd.f32 0.0, %v1517
    %v1519 = vpop.f32.mrf.mxu0
    %1520 = vdwg.mxu0
    %v1521 = vadd.f32 %v1505, %v77
    %v1522 = vadd.f32 %v1518, %v78
    %v1523 = vxor.u32 %v1521, 2147483648
    %v1524 = vxor.u32 %v1522, 2147483648
    %v1525 = vmul.f32 %v1523, 1.442695
    %v1526 = vpow.pop %v1525
    %v1527 = vmul.f32 %v1524, 1.442695
    %v1528 = vpow.pop %v1527
    %v1529 = vadd.f32 %v1526, 1.0
    %v1530 = vadd.f32 %v1528, 1.0
    %v1531 = vrcp.pop %v1529
    %v1532 = vmul.f32 %v1529, %v1531
    %v1533 = vsub.f32 1.0, %v1532
    %v1534 = vmul.f32 %v1531, %v1533
    %v1535 = vadd.f32 %v1531, %v1534
    %vm1536 = vweird.f32 %v1529
    %vm1537 = vweird.f32 %v1531
    %vm1538 = vmor %vm1536, %vm1537
    %v1539 = vsel %vm1538, %v1531, %v1535
    %v1540 = vand.u32 2147483647, %v1529
    %vm1541 = vcmp.eq.f32.partialorder %v1540, 8.507059e+37
    %v1542 = vand.u32 %v1529, 2147483648
    %v1543 = vor.u32 1.1754944e-38, %v1542
    %v1544 = vsel %vm1541, %v1543, %v1539
    %v1545 = vmul.f32 1.0, %v1544
    %v1546 = vrcp.pop %v1530
    %v1547 = vmul.f32 %v1530, %v1546
    %v1548 = vsub.f32 1.0, %v1547
    %v1549 = vmul.f32 %v1546, %v1548
    %v1550 = vadd.f32 %v1546, %v1549
    %vm1551 = vweird.f32 %v1530
    %vm1552 = vweird.f32 %v1546
    %vm1553 = vmor %vm1551, %vm1552
    %v1554 = vsel %vm1553, %v1546, %v1550
    %v1555 = vand.u32 2147483647, %v1530
    %vm1556 = vcmp.eq.f32.partialorder %v1555, 8.507059e+37
    %v1557 = vand.u32 %v1530, 2147483648
    %v1558 = vor.u32 1.1754944e-38, %v1557
    %v1559 = vsel %vm1556, %v1558, %v1554
    %v1560 = vmul.f32 1.0, %v1559
    %v1561 = vtanh.pop %v1522
    %v1562 = vmul.f32 %v1545, %v1385
    %1564 = vrot.lane.b32.xlu0 %v1561, 64
    %v1565 = vpop.permute.xlu0 %1564
    %v1567 = vmul.f32 %v1545, %v1565
    %1569 = vrot.lane.b32.xlu0 %v1567, 64
    %v1570 = vpop.permute.xlu0 %1569
    %v1572 = vadd.f32 %v1562, %v1570
    %v1573 = vtanh.pop %v1572
    %1575 = vrot.lane.b32.xlu0 %v1573, 64
    %v1576 = vpop.permute.xlu0 %1575
    %v1578 = vmul.f32 %v1560, %v1576
    %v1581 = vrot.slane %v1479, 2
    %v1582 = vrot.slane %v1492, 2
    %v1585 = vadd.f32 %v122, %v1581
    %v1586 = vadd.f32 %v136, %v1582
    %v1587 = vxor.u32 %v1585, 2147483648
    %v1588 = vxor.u32 %v1586, 2147483648
    %v1589 = vmul.f32 %v1587, 1.442695
    %v1590 = vpow.pop %v1589
    %v1591 = vmul.f32 %v1588, 1.442695
    %v1592 = vpow.pop %v1591
    %v1593 = vadd.f32 %v1590, 1.0
    %v1594 = vadd.f32 %v1592, 1.0
    %v1595 = vrcp.pop %v1593
    %v1596 = vmul.f32 %v1593, %v1595
    %v1597 = vsub.f32 1.0, %v1596
    %v1598 = vmul.f32 %v1595, %v1597
    %v1599 = vadd.f32 %v1595, %v1598
    %vm1600 = vweird.f32 %v1593
    %vm1601 = vweird.f32 %v1595
    %vm1602 = vmor %vm1600, %vm1601
    %v1603 = vsel %vm1602, %v1595, %v1599
    %v1604 = vand.u32 2147483647, %v1593
    %vm1605 = vcmp.eq.f32.partialorder %v1604, 8.507059e+37
    %v1606 = vand.u32 %v1593, 2147483648
    %v1607 = vor.u32 1.1754944e-38, %v1606
    %v1608 = vsel %vm1605, %v1607, %v1603
    %v1609 = vmul.f32 1.0, %v1608
    %v1610 = vrcp.pop %v1594
    %v1611 = vmul.f32 %v1594, %v1610
    %v1612 = vsub.f32 1.0, %v1611
    %v1613 = vmul.f32 %v1610, %v1612
    %v1614 = vadd.f32 %v1610, %v1613
    %vm1615 = vweird.f32 %v1594
    %vm1616 = vweird.f32 %v1610
    %vm1617 = vmor %vm1615, %vm1616
    %v1618 = vsel %vm1617, %v1610, %v1614
    %v1619 = vand.u32 2147483647, %v1594
    %vm1620 = vcmp.eq.f32.partialorder %v1619, 8.507059e+37
    %v1621 = vand.u32 %v1594, 2147483648
    %v1622 = vor.u32 1.1754944e-38, %v1621
    %v1623 = vsel %vm1620, %v1622, %v1618
    %v1624 = vmul.f32 1.0, %v1623
    %v1625 = vtanh.pop %v1586
    %v1627 = vrot.slane %v1452, 6
    %v1629 = vmul.f32 %v1609, %v1627
    %1631 = vrot.lane.b32.xlu0 %v1625, 64
    %v1632 = vpop.permute.xlu0 %1631
    %v1634 = vmul.f32 %v1609, %v1632
    %1636 = vrot.lane.b32.xlu0 %v1634, 64
    %v1637 = vpop.permute.xlu0 %1636
    %v1639 = vadd.f32 %v1629, %v1637
    %v1640 = vtanh.pop %v1639
    %1642 = vrot.lane.b32.xlu0 %v1640, 64
    %v1643 = vpop.permute.xlu0 %1642
    %v1645 = vmul.f32 %v1624, %v1643
    %v1647 = vrot.slane %v1578, 2
    %1648 = vrot.lane.b32.xlu0 %v1647, 64
    %v1649 = vpop.permute.xlu0 %1648
    %v1651 = vsel %vm194, %v1645, %v1649
    %v1652 = vpack.c.bf16 %v1651, %v1651
    %v1654 = vrot.slane %v1652, 3
    %1656 = vmatpush.bf16.msra.mxu0 %v323
    %1657 = vmatpush.bf16.msra.mxu0 %v319
    %1658 = vmatpush.bf16.msra.mxu0 %v315
    %1659 = vmatpush.bf16.msra.mxu0 %v311
    %1660 = vmatpush.bf16.msra.mxu0 %v307
    %1661 = vmatpush.bf16.msra.mxu0 %v303
    %1662 = vmatpush.bf16.msra.mxu0 %v299
    %1663 = vmatpush.bf16.msra.mxu0 %v295
    %1664 = vmatmul.bf16.gmra.mxu0 %v1654
    %v1665 = vpop.f32.mrf.mxu0
    %v1666 = vadd.f32 0.0, %v1665
    %v1667 = vpop.f32.mrf.mxu0
    %1668 = vdwg.mxu0
    %1669 = vmatpush.bf16.msra.mxu0 %v324
    %1670 = vmatpush.bf16.msra.mxu0 %v320
    %1671 = vmatpush.bf16.msra.mxu0 %v316
    %1672 = vmatpush.bf16.msra.mxu0 %v312
    %1673 = vmatpush.bf16.msra.mxu0 %v308
    %1674 = vmatpush.bf16.msra.mxu0 %v304
    %1675 = vmatpush.bf16.msra.mxu0 %v300
    %1676 = vmatpush.bf16.msra.mxu0 %v296
    %1677 = vmatmul.bf16.gmra.mxu0 %v1654
    %v1678 = vpop.f32.mrf.mxu0
    %v1679 = vadd.f32 0.0, %v1678
    %v1680 = vpop.f32.mrf.mxu0
    %1681 = vdwg.mxu0
    %v1682 = vadd.f32 %v1666, %v77
    %v1683 = vadd.f32 %v1679, %v78
    %v1684 = vxor.u32 %v1682, 2147483648
    %v1685 = vxor.u32 %v1683, 2147483648
    %v1686 = vmul.f32 %v1684, 1.442695
    %v1687 = vpow.pop %v1686
    %v1688 = vmul.f32 %v1685, 1.442695
    %v1689 = vpow.pop %v1688
    %v1690 = vadd.f32 %v1687, 1.0
    %v1691 = vadd.f32 %v1689, 1.0
    %v1692 = vrcp.pop %v1690
    %v1693 = vmul.f32 %v1690, %v1692
    %v1694 = vsub.f32 1.0, %v1693
    %v1695 = vmul.f32 %v1692, %v1694
    %v1696 = vadd.f32 %v1692, %v1695
    %vm1697 = vweird.f32 %v1690
    %vm1698 = vweird.f32 %v1692
    %vm1699 = vmor %vm1697, %vm1698
    %v1700 = vsel %vm1699, %v1692, %v1696
    %v1701 = vand.u32 2147483647, %v1690
    %vm1702 = vcmp.eq.f32.partialorder %v1701, 8.507059e+37
    %v1703 = vand.u32 %v1690, 2147483648
    %v1704 = vor.u32 1.1754944e-38, %v1703
    %v1705 = vsel %vm1702, %v1704, %v1700
    %v1706 = vmul.f32 1.0, %v1705
    %v1707 = vrcp.pop %v1691
    %v1708 = vmul.f32 %v1691, %v1707
    %v1709 = vsub.f32 1.0, %v1708
    %v1710 = vmul.f32 %v1707, %v1709
    %v1711 = vadd.f32 %v1707, %v1710
    %vm1712 = vweird.f32 %v1691
    %vm1713 = vweird.f32 %v1707
    %vm1714 = vmor %vm1712, %vm1713
    %v1715 = vsel %vm1714, %v1707, %v1711
    %v1716 = vand.u32 2147483647, %v1691
    %vm1717 = vcmp.eq.f32.partialorder %v1716, 8.507059e+37
    %v1718 = vand.u32 %v1691, 2147483648
    %v1719 = vor.u32 1.1754944e-38, %v1718
    %v1720 = vsel %vm1717, %v1719, %v1715
    %v1721 = vmul.f32 1.0, %v1720
    %v1722 = vtanh.pop %v1683
    %v1723 = vmul.f32 %v1706, %v1572
    %1725 = vrot.lane.b32.xlu0 %v1722, 64
    %v1726 = vpop.permute.xlu0 %1725
    %v1728 = vmul.f32 %v1706, %v1726
    %1730 = vrot.lane.b32.xlu0 %v1728, 64
    %v1731 = vpop.permute.xlu0 %1730
    %v1733 = vadd.f32 %v1723, %v1731
    %v1734 = vtanh.pop %v1733
    %1736 = vrot.lane.b32.xlu0 %v1734, 64
    %v1737 = vpop.permute.xlu0 %1736
    %v1739 = vmul.f32 %v1721, %v1737
    %v1740 = vpack.c.bf16 %v1739, %v1739
    %v1741 = vperm.slane %v81, 0
    %v1750 = vunpack.c.l.b16 %v65
    %v1751 = vunpack.c.l.b16 %v66
    %v1752 = vunpack.c.l.b16 %v67
    %v1753 = vunpack.c.l.b16 %v68
    %v1754 = vunpack.c.l.b16 %v69
    %v1755 = vunpack.c.l.b16 %v70
    %v1756 = vunpack.c.l.b16 %v71
    %v1757 = vunpack.c.l.b16 %v72
    %v1758 = vpack.c.b16 %v1751, %v1750
    %v1759 = vpack.c.b16 %v1753, %v1752
    %v1760 = vpack.c.b16 %v1755, %v1754
    %v1761 = vpack.c.b16 %v1757, %v1756
    %v1767 = vsel %vm194, %v1740, 0
    %1769 = vmatpush.bf16.msra.mxu0 0
    %1770 = vmatpush.bf16.msra.mxu0 0
    %1771 = vmatpush.bf16.msra.mxu0 0
    %1772 = vmatpush.bf16.msra.mxu0 0
    %1773 = vmatpush.bf16.msra.mxu0 %v1761
    %1774 = vmatpush.bf16.msra.mxu0 %v1760
    %1775 = vmatpush.bf16.msra.mxu0 %v1759
    %1776 = vmatpush.bf16.msra.mxu0 %v1758
    %1777 = vmatmul.bf16.gmra.mxu0 %v1767
    %v1778 = vpop.f32.mrf.mxu0
    %v1779 = vadd.f32 %v1741, %v1778
    %v1780 = vpop.f32.mrf.mxu0
    %1781 = vdwg.mxu0
    %vm1782 = vcmask 25600
    %1783 = vst.msk [vmem:[#allocation5] sm:$0x3] %vm1782, %v1779
    // Predicated region
    $region18: #{lstm_online_model_forward.1} parent=1 // pred_check
      _
    $region19: #{lstm_online_model_forward.1} parent=1 // pred_check_branch
      %1785 = sbr.rel (0) target = $region21
    $region20: #{lstm_online_model_forward.1} parent=1 // pred_region
      %1787 = vsyncadd [#allocation4], 0
      %s1789 = sshll.u32 [#allocation5], 4
      %s1790 = int_to_ptr.vmem [resolvable:$true] %s1789
      %s1791 = sshll.u32 %s3, 4
      %s1792 = int_to_ptr.hbm [resolvable:$true] %s1791
      %1794 = dma.vmem_to_hbm [thread:$0]  %s1790, 32, %s1792, [#allocation4]
    $region21: #{lstm_online_model_forward.1} parent=1 // pred_fallthru
      _
    // Predicated region
    $region22: #{lstm_online_model_forward.1} parent=1 // pred_check
      _
    $region23: #{lstm_online_model_forward.1} parent=1 // pred_check_branch
      %1796 = sbr.rel (0) target = $region25
    $region24: #{lstm_online_model_forward.1} parent=1 // pred_region
      %1798 = dma.done [#allocation4], 32
    $region25: #{lstm_online_model_forward.1} parent=1 // pred_fallthru
      _
    %1799 = vsyncpa [#allocation3], 1
    %1800 = vsyncpa [#allocation4], 1

</llo_original>
